<compile_context>
chip_gen: v6e
topology: v6e:2x2x1
jax: 0.10.0
libtpu: 0.0.40
codegen_flags: <defaults>
</compile_context>

<pallas_src>
import functools

import jax
import jax.numpy as jnp
from jax.experimental import pallas as pl
from jax.experimental.pallas import tpu as pltpu

_VMEM = pl.BlockSpec(memory_space=pltpu.MemorySpace.VMEM)
_SMEM = pl.BlockSpec(memory_space=pltpu.MemorySpace.SMEM)


# ---------------------------------------------------------------------------
# Fused whole-network kernel
# ---------------------------------------------------------------------------
def _fused_forward_kernel(x_ref, a_ref, w0_ref, b0_ref, wtag_ref, btag_ref,
                          wmlp_ref, bmlp_ref, w1_ref, b1_ref,
                          o_ref, h_scr, *, K, n_G, n_M, n_c):
    """Whole forward pass; the activation stays resident on-chip.

    x_ref   : [N, F_in]          bf16
    a_ref   : [N, N]             bf16   (D^-1/2 A D^-1/2)
    w0_ref  : [F_in, C]          bf16    b0_ref  : [1, C]      f32
    wtag_ref: [n_G, (K+1)*C, C]  bf16    btag_ref: [n_G, 1, C]  f32
    wmlp_ref: [n_M, C, C]        bf16    bmlp_ref: [n_M, 1, C]  f32
    w1_ref  : [C, 1]             f32     b1_ref  : [1]          f32 (SMEM)
    o_ref   : [N, 1]             f32
    h_scr   : [N, (K+1)*C]       bf16   VMEM scratch (packed hop features)
    """
    f32 = jnp.float32
    bf16 = jnp.bfloat16
    C = n_c

    a = a_ref[...]                                             # bf16 [N, N]

    # --- lin0 + ReLU (bf16 MXU feed, f32 accumulate / epilogue) ------------
    y = jnp.dot(x_ref[...], w0_ref[...], preferred_element_type=f32)
    x = jnp.maximum(y + b0_ref[...], 0.0)                      # f32 [N, C]

    # --- TAGConv blocks: pack H = [x, Ax, ..., A^K x], one wide matmul -----
    for g in range(n_G):
        h = x                                                  # f32 propagation acc
        h_scr[:, 0:C] = x.astype(bf16)
        for k in range(1, K + 1):
            h = jnp.dot(a, h.astype(bf16), preferred_element_type=f32)
            h_scr[:, k * C:(k + 1) * C] = h.astype(bf16)
        y = jnp.dot(h_scr[...], wtag_ref[g], preferred_element_type=f32)
        x = jnp.maximum(y + btag_ref[g], 0.0)                  # outer F.relu

    # --- MLP blocks ---------------------------------------------------------
    for m in range(n_M):
        y = jnp.dot(x.astype(bf16), wmlp_ref[m], preferred_element_type=f32)
        x = jnp.maximum(y + bmlp_ref[m], 0.0)

    # --- lin1 + ReLU -> [N, 1]  (single narrow store, done once) -----------
    y = jnp.dot(x, w1_ref[...], preferred_element_type=f32)
    o_ref[...] = jnp.maximum(y + b1_ref[0], 0.0).astype(o_ref.dtype)


@functools.partial(jax.jit, static_argnames=("K", "n_G", "n_M"))
def hpt_tagconv_forward(params, x_input, a_norm, K, n_G, n_M):
    n = x_input.shape[0]
    w0, b0 = params["lin0"]
    n_c = w0.shape[1]
    w1, b1 = params["lin1"]

    # Row-concatenate the TAGConv per-hop weights so H @ W_cat = sum_k H_k W_k.
    wtag = jnp.stack([w.reshape((K + 1) * n_c, n_c) for (w, _) in params["tag"]])
    btag = jnp.stack([b.reshape(1, n_c) for (_, b) in params["tag"]])
    wmlp = jnp.stack([w for (w, _) in params["mlp"]])
    bmlp = jnp.stack([b.reshape(1, n_c) for (_, b) in params["mlp"]])

    kernel = functools.partial(_fused_forward_kernel,
                               K=K, n_G=n_G, n_M=n_M, n_c=n_c)

    # TODO(synk): for large N, add a node-row grid over a_norm
    # (BlockSpec((TN, N), ...), dimension_semantics=("parallel",)) and bump
    # vmem_limit_bytes so the dense O(N^2) adjacency is streamed instead of
    # fully VMEM-resident (v7x has only 64 MiB VMEM).
    return pl.pallas_call(
        kernel,
        out_shape=jax.ShapeDtypeStruct((n, 1), jnp.float32),
        in_specs=[_VMEM] * 9 + [_SMEM],
        out_specs=_VMEM,
        scratch_shapes=[pltpu.VMEM((n, (K + 1) * n_c), jnp.bfloat16)],
    )(
        x_input.astype(jnp.bfloat16),
        a_norm.astype(jnp.bfloat16),
        w0.astype(jnp.bfloat16),
        b0.reshape(1, n_c).astype(jnp.float32),
        wtag.astype(jnp.bfloat16),
        btag.astype(jnp.float32),
        wmlp.astype(jnp.bfloat16),
        bmlp.astype(jnp.float32),
        w1.astype(jnp.float32),
        b1.astype(jnp.float32),          # shape (1,), lives in SMEM
    )


# ---------------------------------------------------------------------------
# Glue: dense normalized adjacency (gcn_norm, add_self_loops=False)
# ---------------------------------------------------------------------------
def build_norm_adj(edge_index, num_nodes):
    # A[dst, src] = 1; message flows src -> dst (PyG source_to_target).
    # .max(1.0) dedupes repeated edges (matches coalesced PyG edge sets).
    src, dst = edge_index[0], edge_index[1]
    a = jnp.zeros((num_nodes, num_nodes), jnp.float32).at[dst, src].max(1.0)
    deg = a.sum(axis=1)
    dinv = jnp.where(deg > 0, 1.0 / jnp.sqrt(deg), 0.0)
    return dinv[:, None] * a * dinv[None, :]      # D^{-1/2} A D^{-1/2}


# ---------------------------------------------------------------------------
# Parameter init (deterministic, PyTorch-Linear-style uniform bounds)
# ---------------------------------------------------------------------------
def _init_linear(key, fan_in, fan_out):
    kw, kb = jax.random.split(key)
    bound = 1.0 / jnp.sqrt(jnp.float32(fan_in))
    w = jax.random.uniform(kw, (fan_in, fan_out), jnp.float32, -bound, bound)
    b = jax.random.uniform(kb, (fan_out,), jnp.float32, -bound, bound)
    return w, b


def init_params(key, node_features, n_c, K, n_G, n_M):
    keys = jax.random.split(key, 2 + n_G + n_M)
    params = {}
    params["lin0"] = _init_linear(keys[0], node_features, n_c)
    params["tag"] = []
    for g in range(n_G):
        kk = jax.random.split(keys[1 + g], K + 1)
        bound = 1.0 / jnp.sqrt(jnp.float32(n_c))
        w_stack = jnp.stack([
            jax.random.uniform(kk[k], (n_c, n_c), jnp.float32, -bound, bound)
            for k in range(K + 1)
        ])
        b = jnp.zeros((n_c,), jnp.float32)   # PyG TAGConv bias is zero-init
        params["tag"].append((w_stack, b))
    params["mlp"] = [_init_linear(keys[1 + n_G + m], n_c, n_c) for m in range(n_M)]
    params["lin1"] = _init_linear(keys[-1], n_c, 1)
    return params


if __name__ == "__main__":
    # Small shapes consistent with the module defaults.
    N = 64            # number of nodes
    NODE_FEATURES = 16
    N_C = 128
    K = 3
    N_G = 2
    N_M = 2

    key = jax.random.PRNGKey(0)
    k_x, k_p = jax.random.split(key)

    # Node features [N, node_features].
    x_input = jax.random.normal(k_x, (N, NODE_FEATURES), jnp.float32)

    # Undirected ring graph: edges (i, i+1) in both directions -> [2, 2N].
    idx = jnp.arange(N, dtype=jnp.int32)
    nxt = (idx + 1) % N
    src = jnp.concatenate([idx, nxt])
    dst = jnp.concatenate([nxt, idx])
    edge_index = jnp.stack([src, dst])

    a_norm = build_norm_adj(edge_index, N)
    params = init_params(k_p, NODE_FEATURES, N_C, K, N_G, N_M)

    out = hpt_tagconv_forward(params, x_input, a_norm, K, N_G, N_M)
    out = jax.block_until_ready(out)
    assert out.shape == (N, 1), out.shape
    assert bool(jnp.all(jnp.isfinite(out)))
    print("KERNEL_OK")
</pallas_src>

<mosaic_0001>
module attributes {stable_mosaic.version = 11 : i64} {
  func.func @_fused_forward_kernel(%arg0: memref<64x16xbf16, #tpu.memory_space<vmem>>, %arg1: memref<64x64xbf16, #tpu.memory_space<vmem>>, %arg2: memref<16x128xbf16, #tpu.memory_space<vmem>>, %arg3: memref<1x128xf32, #tpu.memory_space<vmem>>, %arg4: memref<2x512x128xbf16, #tpu.memory_space<vmem>>, %arg5: memref<2x1x128xf32, #tpu.memory_space<vmem>>, %arg6: memref<2x128x128xbf16, #tpu.memory_space<vmem>>, %arg7: memref<2x1x128xf32, #tpu.memory_space<vmem>>, %arg8: memref<128x1xf32, #tpu.memory_space<vmem>>, %arg9: memref<1xf32, #tpu.memory_space<smem>>, %arg10: memref<64x1xf32, #tpu.memory_space<vmem>>, %arg11: memref<64x512xbf16, #tpu.memory_space<vmem>>) attributes {dimension_semantics = [], scalar_prefetch = 0 : i64, scratch_operands = 1 : i64, tpu.core_type = #tpu.core_type<tc>} {
    %c0 = arith.constant 0 : index
    %c0_0 = arith.constant 0 : index
    %0 = vector.load %arg1[%c0, %c0_0] : memref<64x64xbf16, #tpu.memory_space<vmem>>, vector<64x64xbf16>
    %c0_1 = arith.constant 0 : index
    %c0_2 = arith.constant 0 : index
    %1 = vector.load %arg0[%c0_1, %c0_2] : memref<64x16xbf16, #tpu.memory_space<vmem>>, vector<64x16xbf16>
    %c0_3 = arith.constant 0 : index
    %c0_4 = arith.constant 0 : index
    %2 = vector.load %arg2[%c0_3, %c0_4] : memref<16x128xbf16, #tpu.memory_space<vmem>>, vector<16x128xbf16>
    %cst = arith.constant dense<0.000000e+00> : vector<64x128xf32>
    %3 = tpu.matmul %1, %2, %cst {dimension_numbers = #tpu.dot_dimension_numbers<[1], [0], [0], [1], [0, 0, 1, 1], [], []>} : vector<64x16xbf16>, vector<16x128xbf16>, vector<64x128xf32> -> vector<64x128xf32>
    %c0_5 = arith.constant 0 : index
    %c0_6 = arith.constant 0 : index
    %4 = vector.load %arg3[%c0_5, %c0_6] : memref<1x128xf32, #tpu.memory_space<vmem>>, vector<1x128xf32>
    %5 = vector.broadcast %4 : vector<1x128xf32> to vector<64x128xf32>
    %6 = arith.addf %3, %5 : vector<64x128xf32>
    %cst_7 = arith.constant 0.000000e+00 : f32
    %7 = vector.broadcast %cst_7 : f32 to vector<64x128xf32>
    %8 = arith.maximumf %6, %7 : vector<64x128xf32>
    %9 = arith.truncf %8 : vector<64x128xf32> to vector<64x128xbf16>
    %c0_8 = arith.constant 0 : index
    %c0_9 = arith.constant 0 : index
    %10 = vector.load %arg11[%c0_8, %c0_9] : memref<64x512xbf16, #tpu.memory_space<vmem>>, vector<64x128xbf16>
    tpu.vector_store %arg11[%c0_8, %c0_9], %9 {strides = array<i32>} : memref<64x512xbf16, #tpu.memory_space<vmem>>, vector<64x128xbf16>,
    %11 = arith.truncf %8 : vector<64x128xf32> to vector<64x128xbf16>
    %cst_10 = arith.constant dense<0.000000e+00> : vector<64x128xf32>
    %12 = tpu.matmul %0, %11, %cst_10 {dimension_numbers = #tpu.dot_dimension_numbers<[1], [0], [0], [1], [0, 0, 1, 1], [], []>} : vector<64x64xbf16>, vector<64x128xbf16>, vector<64x128xf32> -> vector<64x128xf32>
    %13 = arith.truncf %12 : vector<64x128xf32> to vector<64x128xbf16>
    %c0_11 = arith.constant 0 : index
    %c128 = arith.constant 128 : index
    %14 = vector.load %arg11[%c0_11, %c128] : memref<64x512xbf16, #tpu.memory_space<vmem>>, vector<64x128xbf16>
    tpu.vector_store %arg11[%c0_11, %c128], %13 {strides = array<i32>} : memref<64x512xbf16, #tpu.memory_space<vmem>>, vector<64x128xbf16>,
    %15 = arith.truncf %12 : vector<64x128xf32> to vector<64x128xbf16>
    %cst_12 = arith.constant dense<0.000000e+00> : vector<64x128xf32>
    %16 = tpu.matmul %0, %15, %cst_12 {dimension_numbers = #tpu.dot_dimension_numbers<[1], [0], [0], [1], [0, 0, 1, 1], [], []>} : vector<64x64xbf16>, vector<64x128xbf16>, vector<64x128xf32> -> vector<64x128xf32>
    %17 = arith.truncf %16 : vector<64x128xf32> to vector<64x128xbf16>
    %c0_13 = arith.constant 0 : index
    %c256 = arith.constant 256 : index
    %18 = vector.load %arg11[%c0_13, %c256] : memref<64x512xbf16, #tpu.memory_space<vmem>>, vector<64x128xbf16>
    tpu.vector_store %arg11[%c0_13, %c256], %17 {strides = array<i32>} : memref<64x512xbf16, #tpu.memory_space<vmem>>, vector<64x128xbf16>,
    %19 = arith.truncf %16 : vector<64x128xf32> to vector<64x128xbf16>
    %cst_14 = arith.constant dense<0.000000e+00> : vector<64x128xf32>
    %20 = tpu.matmul %0, %19, %cst_14 {dimension_numbers = #tpu.dot_dimension_numbers<[1], [0], [0], [1], [0, 0, 1, 1], [], []>} : vector<64x64xbf16>, vector<64x128xbf16>, vector<64x128xf32> -> vector<64x128xf32>
    %21 = arith.truncf %20 : vector<64x128xf32> to vector<64x128xbf16>
    %c0_15 = arith.constant 0 : index
    %c384 = arith.constant 384 : index
    %22 = vector.load %arg11[%c0_15, %c384] : memref<64x512xbf16, #tpu.memory_space<vmem>>, vector<64x128xbf16>
    tpu.vector_store %arg11[%c0_15, %c384], %21 {strides = array<i32>} : memref<64x512xbf16, #tpu.memory_space<vmem>>, vector<64x128xbf16>,
    %c0_16 = arith.constant 0 : index
    %c0_17 = arith.constant 0 : index
    %23 = vector.load %arg11[%c0_16, %c0_17] : memref<64x512xbf16, #tpu.memory_space<vmem>>, vector<64x512xbf16>
    %c0_18 = arith.constant 0 : index
    %c0_19 = arith.constant 0 : index
    %c0_20 = arith.constant 0 : index
    %24 = vector.load %arg4[%c0_18, %c0_19, %c0_20] : memref<2x512x128xbf16, #tpu.memory_space<vmem>>, vector<1x512x128xbf16>
    %25 = vector.shape_cast %24 : vector<1x512x128xbf16> to vector<512x128xbf16>
    %cst_21 = arith.constant dense<0.000000e+00> : vector<64x128xf32>
    %26 = tpu.matmul %23, %25, %cst_21 {dimension_numbers = #tpu.dot_dimension_numbers<[1], [0], [0], [1], [0, 0, 1, 1], [], []>} : vector<64x512xbf16>, vector<512x128xbf16>, vector<64x128xf32> -> vector<64x128xf32>
    %c0_22 = arith.constant 0 : index
    %c0_23 = arith.constant 0 : index
    %c0_24 = arith.constant 0 : index
    %27 = vector.load %arg5[%c0_22, %c0_23, %c0_24] : memref<2x1x128xf32, #tpu.memory_space<vmem>>, vector<1x1x128xf32>
    %28 = vector.shape_cast %27 : vector<1x1x128xf32> to vector<1x128xf32>
    %29 = vector.broadcast %28 : vector<1x128xf32> to vector<64x128xf32>
    %30 = arith.addf %26, %29 : vector<64x128xf32>
    %cst_25 = arith.constant 0.000000e+00 : f32
    %31 = vector.broadcast %cst_25 : f32 to vector<64x128xf32>
    %32 = arith.maximumf %30, %31 : vector<64x128xf32>
    %33 = arith.truncf %32 : vector<64x128xf32> to vector<64x128xbf16>
    %c0_26 = arith.constant 0 : index
    %c0_27 = arith.constant 0 : index
    %34 = vector.load %arg11[%c0_26, %c0_27] : memref<64x512xbf16, #tpu.memory_space<vmem>>, vector<64x128xbf16>
    tpu.vector_store %arg11[%c0_26, %c0_27], %33 {strides = array<i32>} : memref<64x512xbf16, #tpu.memory_space<vmem>>, vector<64x128xbf16>,
    %35 = arith.truncf %32 : vector<64x128xf32> to vector<64x128xbf16>
    %cst_28 = arith.constant dense<0.000000e+00> : vector<64x128xf32>
    %36 = tpu.matmul %0, %35, %cst_28 {dimension_numbers = #tpu.dot_dimension_numbers<[1], [0], [0], [1], [0, 0, 1, 1], [], []>} : vector<64x64xbf16>, vector<64x128xbf16>, vector<64x128xf32> -> vector<64x128xf32>
    %37 = arith.truncf %36 : vector<64x128xf32> to vector<64x128xbf16>
    %c0_29 = arith.constant 0 : index
    %c128_30 = arith.constant 128 : index
    %38 = vector.load %arg11[%c0_29, %c128_30] : memref<64x512xbf16, #tpu.memory_space<vmem>>, vector<64x128xbf16>
    tpu.vector_store %arg11[%c0_29, %c128_30], %37 {strides = array<i32>} : memref<64x512xbf16, #tpu.memory_space<vmem>>, vector<64x128xbf16>,
    %39 = arith.truncf %36 : vector<64x128xf32> to vector<64x128xbf16>
    %cst_31 = arith.constant dense<0.000000e+00> : vector<64x128xf32>
    %40 = tpu.matmul %0, %39, %cst_31 {dimension_numbers = #tpu.dot_dimension_numbers<[1], [0], [0], [1], [0, 0, 1, 1], [], []>} : vector<64x64xbf16>, vector<64x128xbf16>, vector<64x128xf32> -> vector<64x128xf32>
    %41 = arith.truncf %40 : vector<64x128xf32> to vector<64x128xbf16>
    %c0_32 = arith.constant 0 : index
    %c256_33 = arith.constant 256 : index
    %42 = vector.load %arg11[%c0_32, %c256_33] : memref<64x512xbf16, #tpu.memory_space<vmem>>, vector<64x128xbf16>
    tpu.vector_store %arg11[%c0_32, %c256_33], %41 {strides = array<i32>} : memref<64x512xbf16, #tpu.memory_space<vmem>>, vector<64x128xbf16>,
    %43 = arith.truncf %40 : vector<64x128xf32> to vector<64x128xbf16>
    %cst_34 = arith.constant dense<0.000000e+00> : vector<64x128xf32>
    %44 = tpu.matmul %0, %43, %cst_34 {dimension_numbers = #tpu.dot_dimension_numbers<[1], [0], [0], [1], [0, 0, 1, 1], [], []>} : vector<64x64xbf16>, vector<64x128xbf16>, vector<64x128xf32> -> vector<64x128xf32>
    %45 = arith.truncf %44 : vector<64x128xf32> to vector<64x128xbf16>
    %c0_35 = arith.constant 0 : index
    %c384_36 = arith.constant 384 : index
    %46 = vector.load %arg11[%c0_35, %c384_36] : memref<64x512xbf16, #tpu.memory_space<vmem>>, vector<64x128xbf16>
    tpu.vector_store %arg11[%c0_35, %c384_36], %45 {strides = array<i32>} : memref<64x512xbf16, #tpu.memory_space<vmem>>, vector<64x128xbf16>,
    %c0_37 = arith.constant 0 : index
    %c0_38 = arith.constant 0 : index
    %47 = vector.load %arg11[%c0_37, %c0_38] : memref<64x512xbf16, #tpu.memory_space<vmem>>, vector<64x512xbf16>
    %c1 = arith.constant 1 : index
    %c0_39 = arith.constant 0 : index
    %c0_40 = arith.constant 0 : index
    %48 = vector.load %arg4[%c1, %c0_39, %c0_40] : memref<2x512x128xbf16, #tpu.memory_space<vmem>>, vector<1x512x128xbf16>
    %49 = vector.shape_cast %48 : vector<1x512x128xbf16> to vector<512x128xbf16>
    %cst_41 = arith.constant dense<0.000000e+00> : vector<64x128xf32>
    %50 = tpu.matmul %47, %49, %cst_41 {dimension_numbers = #tpu.dot_dimension_numbers<[1], [0], [0], [1], [0, 0, 1, 1], [], []>} : vector<64x512xbf16>, vector<512x128xbf16>, vector<64x128xf32> -> vector<64x128xf32>
    %c1_42 = arith.constant 1 : index
    %c0_43 = arith.constant 0 : index
    %c0_44 = arith.constant 0 : index
    %51 = vector.load %arg5[%c1_42, %c0_43, %c0_44] : memref<2x1x128xf32, #tpu.memory_space<vmem>>, vector<1x1x128xf32>
    %52 = vector.shape_cast %51 : vector<1x1x128xf32> to vector<1x128xf32>
    %53 = vector.broadcast %52 : vector<1x128xf32> to vector<64x128xf32>
    %54 = arith.addf %50, %53 : vector<64x128xf32>
    %cst_45 = arith.constant 0.000000e+00 : f32
    %55 = vector.broadcast %cst_45 : f32 to vector<64x128xf32>
    %56 = arith.maximumf %54, %55 : vector<64x128xf32>
    %57 = arith.truncf %56 : vector<64x128xf32> to vector<64x128xbf16>
    %c0_46 = arith.constant 0 : index
    %c0_47 = arith.constant 0 : index
    %c0_48 = arith.constant 0 : index
    %58 = vector.load %arg6[%c0_46, %c0_47, %c0_48] : memref<2x128x128xbf16, #tpu.memory_space<vmem>>, vector<1x128x128xbf16>
    %59 = vector.shape_cast %58 : vector<1x128x128xbf16> to vector<128x128xbf16>
    %cst_49 = arith.constant dense<0.000000e+00> : vector<64x128xf32>
    %60 = tpu.matmul %57, %59, %cst_49 {dimension_numbers = #tpu.dot_dimension_numbers<[1], [0], [0], [1], [0, 0, 1, 1], [], []>} : vector<64x128xbf16>, vector<128x128xbf16>, vector<64x128xf32> -> vector<64x128xf32>
    %c0_50 = arith.constant 0 : index
    %c0_51 = arith.constant 0 : index
    %c0_52 = arith.constant 0 : index
    %61 = vector.load %arg7[%c0_50, %c0_51, %c0_52] : memref<2x1x128xf32, #tpu.memory_space<vmem>>, vector<1x1x128xf32>
    %62 = vector.shape_cast %61 : vector<1x1x128xf32> to vector<1x128xf32>
    %63 = vector.broadcast %62 : vector<1x128xf32> to vector<64x128xf32>
    %64 = arith.addf %60, %63 : vector<64x128xf32>
    %cst_53 = arith.constant 0.000000e+00 : f32
    %65 = vector.broadcast %cst_53 : f32 to vector<64x128xf32>
    %66 = arith.maximumf %64, %65 : vector<64x128xf32>
    %67 = arith.truncf %66 : vector<64x128xf32> to vector<64x128xbf16>
    %c1_54 = arith.constant 1 : index
    %c0_55 = arith.constant 0 : index
    %c0_56 = arith.constant 0 : index
    %68 = vector.load %arg6[%c1_54, %c0_55, %c0_56] : memref<2x128x128xbf16, #tpu.memory_space<vmem>>, vector<1x128x128xbf16>
    %69 = vector.shape_cast %68 : vector<1x128x128xbf16> to vector<128x128xbf16>
    %cst_57 = arith.constant dense<0.000000e+00> : vector<64x128xf32>
    %70 = tpu.matmul %67, %69, %cst_57 {dimension_numbers = #tpu.dot_dimension_numbers<[1], [0], [0], [1], [0, 0, 1, 1], [], []>} : vector<64x128xbf16>, vector<128x128xbf16>, vector<64x128xf32> -> vector<64x128xf32>
    %c1_58 = arith.constant 1 : index
    %c0_59 = arith.constant 0 : index
    %c0_60 = arith.constant 0 : index
    %71 = vector.load %arg7[%c1_58, %c0_59, %c0_60] : memref<2x1x128xf32, #tpu.memory_space<vmem>>, vector<1x1x128xf32>
    %72 = vector.shape_cast %71 : vector<1x1x128xf32> to vector<1x128xf32>
    %73 = vector.broadcast %72 : vector<1x128xf32> to vector<64x128xf32>
    %74 = arith.addf %70, %73 : vector<64x128xf32>
    %cst_61 = arith.constant 0.000000e+00 : f32
    %75 = vector.broadcast %cst_61 : f32 to vector<64x128xf32>
    %76 = arith.maximumf %74, %75 : vector<64x128xf32>
    %c0_62 = arith.constant 0 : index
    %c0_63 = arith.constant 0 : index
    %77 = vector.load %arg8[%c0_62, %c0_63] : memref<128x1xf32, #tpu.memory_space<vmem>>, vector<128x1xf32>
    %cst_64 = arith.constant dense<0.000000e+00> : vector<64x1xf32>
    %78 = tpu.matmul %76, %77, %cst_64 {dimension_numbers = #tpu.dot_dimension_numbers<[1], [0], [0], [1], [0, 0, 1, 1], [], []>} : vector<64x128xf32>, vector<128x1xf32>, vector<64x1xf32> -> vector<64x1xf32>
    %c0_65 = arith.constant 0 : index
    %79 = memref.load %arg9[%c0_65] : memref<1xf32, #tpu.memory_space<smem>>
    %80 = vector.broadcast %79 : f32 to vector<64x1xf32>
    %81 = arith.addf %78, %80 : vector<64x1xf32>
    %cst_66 = arith.constant 0.000000e+00 : f32
    %82 = vector.broadcast %cst_66 : f32 to vector<64x1xf32>
    %83 = arith.maximumf %81, %82 : vector<64x1xf32>
    %c0_67 = arith.constant 0 : index
    %c0_68 = arith.constant 0 : index
    %84 = vector.load %arg10[%c0_67, %c0_68] : memref<64x1xf32, #tpu.memory_space<vmem>>, vector<64x1xf32>
    tpu.vector_store %arg10[%c0_67, %c0_68], %83 {strides = array<i32>} : memref<64x1xf32, #tpu.memory_space<vmem>>, vector<64x1xf32>,
    return
  }
}

</mosaic_0001>

<llo_original>
// kernel: hpt_tagconv_forward.1
$region0: #{hpt_tagconv_forward.1}
  #allocation0 [shape = 'u32[]', space=smem, size = 0x4, offset = 0x4, fixed_abs, tag = 'smem constant byte address 0x4 - core index']
  #allocation1 [shape = 'u32[144,128]{1,0:T(1,128)}', space=vmem, size = 0x12000, scoped, tag = 'internal scratch']
  #allocation2 [shape = 'bf16[64,512]{1,0:T(8,128)(2,1)}', space=vmem, size = 0x10000, scoped, tag = 'scratch operand']
  #allocation3 [shape = 'f32[1]{0:T(128)S(6)}', space=smem, size = 0x200, scoped, tag = 'scoped memory for hpt_tagconv_forward.1']
  %s0 = inlined_call_operand.vmem [shape: bf16[64,16], index: 0, kind: input, shape index: {}]
  %s1 = inlined_call_operand.vmem [shape: bf16[64,64], index: 1, kind: input, shape index: {}]
  %s2 = inlined_call_operand.vmem [shape: bf16[16,128], index: 2, kind: input, shape index: {}]
  %s3 = inlined_call_operand.vmem [shape: f32[1,128], index: 3, kind: input, shape index: {}]
  %s4 = inlined_call_operand.vmem [shape: bf16[2,512,128], index: 4, kind: input, shape index: {}]
  %s5 = inlined_call_operand.vmem [shape: f32[2,1,128], index: 5, kind: input, shape index: {}]
  %s6 = inlined_call_operand.vmem [shape: bf16[2,128,128], index: 6, kind: input, shape index: {}]
  %s7 = inlined_call_operand.vmem [shape: f32[2,1,128], index: 7, kind: input, shape index: {}]
  %s8 = inlined_call_operand.vmem [shape: f32[128,1], index: 8, kind: input, shape index: {}]
  %s9 = inlined_call_operand.<no memory space> [shape: f32[1], index: 9, kind: input, shape index: {}]
  %s10 = inlined_call_operand.vmem [shape: f32[64,1], index: 10, kind: output, shape index: {}]
  %s11 = sld [smem:[#allocation0]]
  $region50: #{hpt_tagconv_forward.1} parent=0
    _
  %s13 = ssub.s32 1, %s11
  %s14 = scalar_select 0, %s13, %s11
  %15 = sst [smem:[#allocation3]] %s9
  // Predicated region
  $region2: #{hpt_tagconv_forward.1} parent=0 // pred_check
    _
  $region3: #{hpt_tagconv_forward.1} parent=0 // pred_check_branch
    %17 = sbr.rel (0) target = $region5
  $region4: #{hpt_tagconv_forward.1} parent=0 // pred_region
    _
  $region5: #{hpt_tagconv_forward.1} parent=0 // pred_fallthru
    _
  // Predicated region
  $region6: #{hpt_tagconv_forward.1} parent=0 // pred_check
    _
  $region7: #{hpt_tagconv_forward.1} parent=0 // pred_check_branch
    %19 = sbr.rel (0) target = $region9
  $region8: #{hpt_tagconv_forward.1} parent=0 // pred_region
    _
  $region9: #{hpt_tagconv_forward.1} parent=0 // pred_fallthru
    _
  // Predicated region
  $region10: #{hpt_tagconv_forward.1} parent=0 // pred_check
    _
  $region11: #{hpt_tagconv_forward.1} parent=0 // pred_check_branch
    %21 = sbr.rel (0) target = $region13
  $region12: #{hpt_tagconv_forward.1} parent=0 // pred_region
    _
  $region13: #{hpt_tagconv_forward.1} parent=0 // pred_fallthru
    _
  // Predicated region
  $region14: #{hpt_tagconv_forward.1} parent=0 // pred_check
    _
  $region15: #{hpt_tagconv_forward.1} parent=0 // pred_check_branch
    %23 = sbr.rel (0) target = $region17
  $region16: #{hpt_tagconv_forward.1} parent=0 // pred_region
    _
  $region17: #{hpt_tagconv_forward.1} parent=0 // pred_fallthru
    _
  // Predicated region
  $region18: #{hpt_tagconv_forward.1} parent=0 // pred_check
    _
  $region19: #{hpt_tagconv_forward.1} parent=0 // pred_check_branch
    %25 = sbr.rel (0) target = $region21
  $region20: #{hpt_tagconv_forward.1} parent=0 // pred_region
    _
  $region21: #{hpt_tagconv_forward.1} parent=0 // pred_fallthru
    _
  // Predicated region
  $region22: #{hpt_tagconv_forward.1} parent=0 // pred_check
    _
  $region23: #{hpt_tagconv_forward.1} parent=0 // pred_check_branch
    %27 = sbr.rel (0) target = $region25
  $region24: #{hpt_tagconv_forward.1} parent=0 // pred_region
    _
  $region25: #{hpt_tagconv_forward.1} parent=0 // pred_fallthru
    _
  // Predicated region
  $region26: #{hpt_tagconv_forward.1} parent=0 // pred_check
    _
  $region27: #{hpt_tagconv_forward.1} parent=0 // pred_check_branch
    %29 = sbr.rel (0) target = $region29
  $region28: #{hpt_tagconv_forward.1} parent=0 // pred_region
    _
  $region29: #{hpt_tagconv_forward.1} parent=0 // pred_fallthru
    _
  // Predicated region
  $region30: #{hpt_tagconv_forward.1} parent=0 // pred_check
    _
  $region31: #{hpt_tagconv_forward.1} parent=0 // pred_check_branch
    %31 = sbr.rel (0) target = $region33
  $region32: #{hpt_tagconv_forward.1} parent=0 // pred_region
    _
  $region33: #{hpt_tagconv_forward.1} parent=0 // pred_fallthru
    _
  // Predicated region
  $region34: #{hpt_tagconv_forward.1} parent=0 // pred_check
    _
  $region35: #{hpt_tagconv_forward.1} parent=0 // pred_check_branch
    %33 = sbr.rel (0) target = $region37
  $region36: #{hpt_tagconv_forward.1} parent=0 // pred_region
    _
  $region37: #{hpt_tagconv_forward.1} parent=0 // pred_fallthru
    _
  // Predicated region
  $region38: #{hpt_tagconv_forward.1} parent=0 // pred_check
    _
  $region39: #{hpt_tagconv_forward.1} parent=0 // pred_check_branch
    %35 = sbr.rel (0) target = $region41
  $region40: #{hpt_tagconv_forward.1} parent=0 // pred_region
    _
  $region41: #{hpt_tagconv_forward.1} parent=0 // pred_fallthru
    _
  %v37 = vld [vmem:[%s1] sm:$0xf]
  %v38 = vld [vmem:[%s1 + $0x4] sm:$0xf]
  %v39 = vld [vmem:[%s1 + $0x8] sm:$0xf]
  %v40 = vld [vmem:[%s1 + $0xc] sm:$0xf]
  %v41 = vld [vmem:[%s1 + $0x10] sm:$0xf]
  %v42 = vld [vmem:[%s1 + $0x14] sm:$0xf]
  %v43 = vld [vmem:[%s1 + $0x18] sm:$0xf]
  %v44 = vld [vmem:[%s1 + $0x1c] sm:$0xf]
  %v45 = vld [vmem:[%s0] sm:$0xf]
  %v46 = vld [vmem:[%s0 + $0x4] sm:$0xf]
  %v47 = vld [vmem:[%s0 + $0x8] sm:$0xf]
  %v48 = vld [vmem:[%s0 + $0xc] sm:$0xf]
  %v49 = vld [vmem:[%s0 + $0x10] sm:$0xf]
  %v50 = vld [vmem:[%s0 + $0x14] sm:$0xf]
  %v51 = vld [vmem:[%s0 + $0x18] sm:$0xf]
  %v52 = vld [vmem:[%s0 + $0x1c] sm:$0xf]
  %v53 = vld [vmem:[%s2] sm:$0xf]
  %v54 = vld [vmem:[%s2 + $0x4] sm:$0xf]
  %v55 = vld [vmem:[%s3] sm:$0x1]
  %v57 = vlaneseq
  %v58 = vshrl.u32 %v57, 7
  %v59 = vsub.s32 0, %v58
  %v60 = vrot.slane %v55, %v59
  %v70 = vunpack.c.l.b16 %v45
  %v71 = vunpack.c.l.b16 %v46
  %v72 = vunpack.c.l.b16 %v47
  %v73 = vunpack.c.l.b16 %v48
  %v74 = vunpack.c.l.b16 %v49
  %v75 = vunpack.c.l.b16 %v50
  %v76 = vunpack.c.l.b16 %v51
  %v77 = vunpack.c.l.b16 %v52
  %v78 = vpack.c.b16 %v71, %v70
  %v79 = vpack.c.b16 %v73, %v72
  %v80 = vpack.c.b16 %v75, %v74
  %v81 = vpack.c.b16 %v77, %v76
  %v84 = vunpack.c.l.b16 %v53
  %v85 = vunpack.c.l.b16 %v54
  %v86 = vpack.c.b16 %v85, %v84
  %vm88 = vcmask 130048
  %v90 = vsel %vm88, %v78, 0
  %v93 = vsel %vm88, %v79, 0
  %v96 = vsel %vm88, %v80, 0
  %v99 = vsel %vm88, %v81, 0
  %101 = vmatprep.subr.bf16.mxu0 0
  %102 = vmatpush1.bf16.msra.mxu0 0
  %103 = vmatprep.subr.bf16.mxu0 0
  %104 = vmatpush1.bf16.msra.mxu0 0
  %105 = vmatprep.subr.bf16.mxu0 0
  %106 = vmatpush1.bf16.msra.mxu0 0
  %107 = vmatprep.subr.bf16.mxu0 0
  %108 = vmatpush1.bf16.msra.mxu0 0
  %109 = vmatprep.subr.bf16.mxu0 0
  %110 = vmatpush1.bf16.msra.mxu0 0
  %111 = vmatprep.subr.bf16.mxu0 0
  %112 = vmatpush1.bf16.msra.mxu0 0
  %113 = vmatprep.subr.bf16.mxu0 0
  %114 = vmatpush1.bf16.msra.mxu0 0
  %115 = vmatprep.subr.bf16.mxu0 0
  %116 = vmatpush1.bf16.msra.mxu0 %v86
  %117 = vmatprep.subr.bf16.mxu0 0
  %118 = vmatpush2.bf16.msra.mxu0 0
  %119 = vmatprep.subr.bf16.mxu0 0
  %120 = vmatpush2.bf16.msra.mxu0 0
  %121 = vmatprep.subr.bf16.mxu0 0
  %122 = vmatpush2.bf16.msra.mxu0 0
  %123 = vmatprep.subr.bf16.mxu0 0
  %124 = vmatpush2.bf16.msra.mxu0 0
  %125 = vmatprep.subr.bf16.mxu0 0
  %126 = vmatpush2.bf16.msra.mxu0 0
  %127 = vmatprep.subr.bf16.mxu0 0
  %128 = vmatpush2.bf16.msra.mxu0 0
  %129 = vmatprep.subr.bf16.mxu0 0
  %130 = vmatpush2.bf16.msra.mxu0 0
  %131 = vmatprep.subr.bf16.mxu0 0
  %132 = vmatpush2.bf16.msra.mxu0 0
  %133 = vmatprep.mubr.bf16.mxu0 0
  %134 = vmatmul.mubr.bf16.gmra.mxu0 %v90
  %v135 = vpop.f32.mrf.mxu0
  %v136 = vadd.f32 %v60, %v135
  %v137 = vpop.f32.mrf.mxu0
  %v138 = vpop.f32.mrf.mxu0
  %v139 = vadd.f32 %v60, %v138
  %v140 = vpop.f32.mrf.mxu0
  %141 = vmatprep.mubr.bf16.mxu0 0
  %142 = vmatmul.mubr.bf16.gmra.mxu0 %v93
  %v143 = vpop.f32.mrf.mxu0
  %v144 = vadd.f32 %v60, %v143
  %v145 = vpop.f32.mrf.mxu0
  %v146 = vpop.f32.mrf.mxu0
  %v147 = vadd.f32 %v60, %v146
  %v148 = vpop.f32.mrf.mxu0
  %149 = vmatprep.mubr.bf16.mxu0 0
  %150 = vmatmul.mubr.bf16.gmra.mxu0 %v96
  %v151 = vpop.f32.mrf.mxu0
  %v152 = vadd.f32 %v60, %v151
  %v153 = vpop.f32.mrf.mxu0
  %v154 = vpop.f32.mrf.mxu0
  %v155 = vadd.f32 %v60, %v154
  %v156 = vpop.f32.mrf.mxu0
  %157 = vmatprep.mubr.bf16.mxu0 0
  %158 = vmatmul.mubr.bf16.gmra.mxu0 %v99
  %v159 = vpop.f32.mrf.mxu0
  %v160 = vadd.f32 %v60, %v159
  %v161 = vpop.f32.mrf.mxu0
  %v162 = vpop.f32.mrf.mxu0
  %v163 = vadd.f32 %v60, %v162
  %v164 = vpop.f32.mrf.mxu0
  %165 = vdwg.mxu0
  %v166 = vmax.f32 %v136, 0.0
  %v167 = vmax.f32 %v139, 0.0
  %v168 = vmax.f32 %v144, 0.0
  %v169 = vmax.f32 %v147, 0.0
  %v170 = vmax.f32 %v152, 0.0
  %v171 = vmax.f32 %v155, 0.0
  %v172 = vmax.f32 %v160, 0.0
  %v173 = vmax.f32 %v163, 0.0
  %v174 = vpack.c.bf16 %v167, %v166
  %v175 = vpack.c.bf16 %v169, %v168
  %v176 = vpack.c.bf16 %v171, %v170
  %v177 = vpack.c.bf16 %v173, %v172
  %v182 = vunpack.c.l.b16 %v174
  %v183 = vunpack.c.h.b16 %v174
  %v184 = vunpack.c.l.b16 %v175
  %v185 = vunpack.c.h.b16 %v175
  %v186 = vunpack.c.l.b16 %v176
  %v187 = vunpack.c.h.b16 %v176
  %v188 = vunpack.c.l.b16 %v177
  %v189 = vunpack.c.h.b16 %v177
  %v190 = vpack.c.b16 %v182, %v182
  %v191 = vpack.c.b16 %v183, %v183
  %v192 = vpack.c.b16 %v184, %v184
  %v193 = vpack.c.b16 %v185, %v185
  %v194 = vpack.c.b16 %v186, %v186
  %v195 = vpack.c.b16 %v187, %v187
  %v196 = vpack.c.b16 %v188, %v188
  %v197 = vpack.c.b16 %v189, %v189
  %206 = vst [vmem:[#allocation2] sm:$0xf] %v190
  %207 = vst [vmem:[#allocation2 + $0x10] sm:$0xf] %v191
  %208 = vst [vmem:[#allocation2 + $0x20] sm:$0xf] %v192
  %209 = vst [vmem:[#allocation2 + $0x30] sm:$0xf] %v193
  %210 = vst [vmem:[#allocation2 + $0x40] sm:$0xf] %v194
  %211 = vst [vmem:[#allocation2 + $0x50] sm:$0xf] %v195
  %212 = vst [vmem:[#allocation2 + $0x60] sm:$0xf] %v196
  %213 = vst [vmem:[#allocation2 + $0x70] sm:$0xf] %v197
  %v222 = vunpack.c.l.b16 %v37
  %v223 = vunpack.c.l.b16 %v38
  %v224 = vunpack.c.l.b16 %v39
  %v225 = vunpack.c.l.b16 %v40
  %v226 = vunpack.c.l.b16 %v41
  %v227 = vunpack.c.l.b16 %v42
  %v228 = vunpack.c.l.b16 %v43
  %v229 = vunpack.c.l.b16 %v44
  %v230 = vpack.c.b16 %v223, %v222
  %v231 = vpack.c.b16 %v225, %v224
  %v232 = vpack.c.b16 %v227, %v226
  %v233 = vpack.c.b16 %v229, %v228
  %vm234 = vcmask 523264
  %v236 = vsel %vm234, %v230, 0
  %v239 = vsel %vm234, %v231, 0
  %v242 = vsel %vm234, %v232, 0
  %v245 = vsel %vm234, %v233, 0
  %247 = vmatprep.subr.bf16.mxu0 0
  %248 = vmatpush1.bf16.msra.mxu0 0
  %249 = vmatprep.subr.bf16.mxu0 0
  %250 = vmatpush1.bf16.msra.mxu0 0
  %251 = vmatprep.subr.bf16.mxu0 0
  %252 = vmatpush1.bf16.msra.mxu0 0
  %253 = vmatprep.subr.bf16.mxu0 0
  %254 = vmatpush1.bf16.msra.mxu0 0
  %255 = vmatprep.subr.bf16.mxu0 0
  %256 = vmatpush1.bf16.msra.mxu0 %v177
  %257 = vmatprep.subr.bf16.mxu0 0
  %258 = vmatpush1.bf16.msra.mxu0 %v176
  %259 = vmatprep.subr.bf16.mxu0 0
  %260 = vmatpush1.bf16.msra.mxu0 %v175
  %261 = vmatprep.subr.bf16.mxu0 0
  %262 = vmatpush1.bf16.msra.mxu0 %v174
  %263 = vmatprep.subr.bf16.mxu0 0
  %264 = vmatpush2.bf16.msra.mxu0 0
  %265 = vmatprep.subr.bf16.mxu0 0
  %266 = vmatpush2.bf16.msra.mxu0 0
  %267 = vmatprep.subr.bf16.mxu0 0
  %268 = vmatpush2.bf16.msra.mxu0 0
  %269 = vmatprep.subr.bf16.mxu0 0
  %270 = vmatpush2.bf16.msra.mxu0 0
  %271 = vmatprep.subr.bf16.mxu0 0
  %272 = vmatpush2.bf16.msra.mxu0 0
  %273 = vmatprep.subr.bf16.mxu0 0
  %274 = vmatpush2.bf16.msra.mxu0 0
  %275 = vmatprep.subr.bf16.mxu0 0
  %276 = vmatpush2.bf16.msra.mxu0 0
  %277 = vmatprep.subr.bf16.mxu0 0
  %278 = vmatpush2.bf16.msra.mxu0 0
  %279 = vmatprep.mubr.bf16.mxu0 0
  %280 = vmatmul.mubr.bf16.gmra.mxu0 %v236
  %v281 = vpop.f32.mrf.mxu0
  %v282 = vadd.f32 0.0, %v281
  %v283 = vpop.f32.mrf.mxu0
  %v284 = vpop.f32.mrf.mxu0
  %v285 = vadd.f32 0.0, %v284
  %v286 = vpop.f32.mrf.mxu0
  %287 = vmatprep.mubr.bf16.mxu0 0
  %288 = vmatmul.mubr.bf16.gmra.mxu0 %v239
  %v289 = vpop.f32.mrf.mxu0
  %v290 = vadd.f32 0.0, %v289
  %v291 = vpop.f32.mrf.mxu0
  %v292 = vpop.f32.mrf.mxu0
  %v293 = vadd.f32 0.0, %v292
  %v294 = vpop.f32.mrf.mxu0
  %295 = vmatprep.mubr.bf16.mxu0 0
  %296 = vmatmul.mubr.bf16.gmra.mxu0 %v242
  %v297 = vpop.f32.mrf.mxu0
  %v298 = vadd.f32 0.0, %v297
  %v299 = vpop.f32.mrf.mxu0
  %v300 = vpop.f32.mrf.mxu0
  %v301 = vadd.f32 0.0, %v300
  %v302 = vpop.f32.mrf.mxu0
  %303 = vmatprep.mubr.bf16.mxu0 0
  %304 = vmatmul.mubr.bf16.gmra.mxu0 %v245
  %v305 = vpop.f32.mrf.mxu0
  %v306 = vadd.f32 0.0, %v305
  %v307 = vpop.f32.mrf.mxu0
  %v308 = vpop.f32.mrf.mxu0
  %v309 = vadd.f32 0.0, %v308
  %v310 = vpop.f32.mrf.mxu0
  %311 = vdwg.mxu0
  %v312 = vpack.c.bf16 %v285, %v282
  %v313 = vpack.c.bf16 %v293, %v290
  %v314 = vpack.c.bf16 %v301, %v298
  %v315 = vpack.c.bf16 %v309, %v306
  %v320 = vunpack.c.l.b16 %v312
  %v321 = vunpack.c.h.b16 %v312
  %v322 = vunpack.c.l.b16 %v313
  %v323 = vunpack.c.h.b16 %v313
  %v324 = vunpack.c.l.b16 %v314
  %v325 = vunpack.c.h.b16 %v314
  %v326 = vunpack.c.l.b16 %v315
  %v327 = vunpack.c.h.b16 %v315
  %v328 = vpack.c.b16 %v320, %v320
  %v329 = vpack.c.b16 %v321, %v321
  %v330 = vpack.c.b16 %v322, %v322
  %v331 = vpack.c.b16 %v323, %v323
  %v332 = vpack.c.b16 %v324, %v324
  %v333 = vpack.c.b16 %v325, %v325
  %v334 = vpack.c.b16 %v326, %v326
  %v335 = vpack.c.b16 %v327, %v327
  %344 = vst [vmem:[#allocation2 + $0x4] sm:$0xf] %v328
  %345 = vst [vmem:[#allocation2 + $0x14] sm:$0xf] %v329
  %346 = vst [vmem:[#allocation2 + $0x24] sm:$0xf] %v330
  %347 = vst [vmem:[#allocation2 + $0x34] sm:$0xf] %v331
  %348 = vst [vmem:[#allocation2 + $0x44] sm:$0xf] %v332
  %349 = vst [vmem:[#allocation2 + $0x54] sm:$0xf] %v333
  %350 = vst [vmem:[#allocation2 + $0x64] sm:$0xf] %v334
  %351 = vst [vmem:[#allocation2 + $0x74] sm:$0xf] %v335
  %352 = vmatprep.subr.bf16.mxu0 0
  %353 = vmatpush1.bf16.msra.mxu0 0
  %354 = vmatprep.subr.bf16.mxu0 0
  %355 = vmatpush1.bf16.msra.mxu0 0
  %356 = vmatprep.subr.bf16.mxu0 0
  %357 = vmatpush1.bf16.msra.mxu0 0
  %358 = vmatprep.subr.bf16.mxu0 0
  %359 = vmatpush1.bf16.msra.mxu0 0
  %360 = vmatprep.subr.bf16.mxu0 0
  %361 = vmatpush1.bf16.msra.mxu0 %v315
  %362 = vmatprep.subr.bf16.mxu0 0
  %363 = vmatpush1.bf16.msra.mxu0 %v314
  %364 = vmatprep.subr.bf16.mxu0 0
  %365 = vmatpush1.bf16.msra.mxu0 %v313
  %366 = vmatprep.subr.bf16.mxu0 0
  %367 = vmatpush1.bf16.msra.mxu0 %v312
  %368 = vmatprep.subr.bf16.mxu0 0
  %369 = vmatpush2.bf16.msra.mxu0 0
  %370 = vmatprep.subr.bf16.mxu0 0
  %371 = vmatpush2.bf16.msra.mxu0 0
  %372 = vmatprep.subr.bf16.mxu0 0
  %373 = vmatpush2.bf16.msra.mxu0 0
  %374 = vmatprep.subr.bf16.mxu0 0
  %375 = vmatpush2.bf16.msra.mxu0 0
  %376 = vmatprep.subr.bf16.mxu0 0
  %377 = vmatpush2.bf16.msra.mxu0 0
  %378 = vmatprep.subr.bf16.mxu0 0
  %379 = vmatpush2.bf16.msra.mxu0 0
  %380 = vmatprep.subr.bf16.mxu0 0
  %381 = vmatpush2.bf16.msra.mxu0 0
  %382 = vmatprep.subr.bf16.mxu0 0
  %383 = vmatpush2.bf16.msra.mxu0 0
  %384 = vmatprep.mubr.bf16.mxu0 0
  %385 = vmatmul.mubr.bf16.gmra.mxu0 %v236
  %v386 = vpop.f32.mrf.mxu0
  %v387 = vadd.f32 0.0, %v386
  %v388 = vpop.f32.mrf.mxu0
  %v389 = vpop.f32.mrf.mxu0
  %v390 = vadd.f32 0.0, %v389
  %v391 = vpop.f32.mrf.mxu0
  %392 = vmatprep.mubr.bf16.mxu0 0
  %393 = vmatmul.mubr.bf16.gmra.mxu0 %v239
  %v394 = vpop.f32.mrf.mxu0
  %v395 = vadd.f32 0.0, %v394
  %v396 = vpop.f32.mrf.mxu0
  %v397 = vpop.f32.mrf.mxu0
  %v398 = vadd.f32 0.0, %v397
  %v399 = vpop.f32.mrf.mxu0
  %400 = vmatprep.mubr.bf16.mxu0 0
  %401 = vmatmul.mubr.bf16.gmra.mxu0 %v242
  %v402 = vpop.f32.mrf.mxu0
  %v403 = vadd.f32 0.0, %v402
  %v404 = vpop.f32.mrf.mxu0
  %v405 = vpop.f32.mrf.mxu0
  %v406 = vadd.f32 0.0, %v405
  %v407 = vpop.f32.mrf.mxu0
  %408 = vmatprep.mubr.bf16.mxu0 0
  %409 = vmatmul.mubr.bf16.gmra.mxu0 %v245
  %v410 = vpop.f32.mrf.mxu0
  %v411 = vadd.f32 0.0, %v410
  %v412 = vpop.f32.mrf.mxu0
  %v413 = vpop.f32.mrf.mxu0
  %v414 = vadd.f32 0.0, %v413
  %v415 = vpop.f32.mrf.mxu0
  %416 = vdwg.mxu0
  %v417 = vpack.c.bf16 %v390, %v387
  %v418 = vpack.c.bf16 %v398, %v395
  %v419 = vpack.c.bf16 %v406, %v403
  %v420 = vpack.c.bf16 %v414, %v411
  %v425 = vunpack.c.l.b16 %v417
  %v426 = vunpack.c.h.b16 %v417
  %v427 = vunpack.c.l.b16 %v418
  %v428 = vunpack.c.h.b16 %v418
  %v429 = vunpack.c.l.b16 %v419
  %v430 = vunpack.c.h.b16 %v419
  %v431 = vunpack.c.l.b16 %v420
  %v432 = vunpack.c.h.b16 %v420
  %v433 = vpack.c.b16 %v425, %v425
  %v434 = vpack.c.b16 %v426, %v426
  %v435 = vpack.c.b16 %v427, %v427
  %v436 = vpack.c.b16 %v428, %v428
  %v437 = vpack.c.b16 %v429, %v429
  %v438 = vpack.c.b16 %v430, %v430
  %v439 = vpack.c.b16 %v431, %v431
  %v440 = vpack.c.b16 %v432, %v432
  %449 = vst [vmem:[#allocation2 + $0x8] sm:$0xf] %v433
  %450 = vst [vmem:[#allocation2 + $0x18] sm:$0xf] %v434
  %451 = vst [vmem:[#allocation2 + $0x28] sm:$0xf] %v435
  %452 = vst [vmem:[#allocation2 + $0x38] sm:$0xf] %v436
  %453 = vst [vmem:[#allocation2 + $0x48] sm:$0xf] %v437
  %454 = vst [vmem:[#allocation2 + $0x58] sm:$0xf] %v438
  %455 = vst [vmem:[#allocation2 + $0x68] sm:$0xf] %v439
  %456 = vst [vmem:[#allocation2 + $0x78] sm:$0xf] %v440
  %457 = vmatprep.subr.bf16.mxu0 0
  %458 = vmatpush1.bf16.msra.mxu0 0
  %459 = vmatprep.subr.bf16.mxu0 0
  %460 = vmatpush1.bf16.msra.mxu0 0
  %461 = vmatprep.subr.bf16.mxu0 0
  %462 = vmatpush1.bf16.msra.mxu0 0
  %463 = vmatprep.subr.bf16.mxu0 0
  %464 = vmatpush1.bf16.msra.mxu0 0
  %465 = vmatprep.subr.bf16.mxu0 0
  %466 = vmatpush1.bf16.msra.mxu0 %v420
  %467 = vmatprep.subr.bf16.mxu0 0
  %468 = vmatpush1.bf16.msra.mxu0 %v419
  %469 = vmatprep.subr.bf16.mxu0 0
  %470 = vmatpush1.bf16.msra.mxu0 %v418
  %471 = vmatprep.subr.bf16.mxu0 0
  %472 = vmatpush1.bf16.msra.mxu0 %v417
  %473 = vmatprep.subr.bf16.mxu0 0
  %474 = vmatpush2.bf16.msra.mxu0 0
  %475 = vmatprep.subr.bf16.mxu0 0
  %476 = vmatpush2.bf16.msra.mxu0 0
  %477 = vmatprep.subr.bf16.mxu0 0
  %478 = vmatpush2.bf16.msra.mxu0 0
  %479 = vmatprep.subr.bf16.mxu0 0
  %480 = vmatpush2.bf16.msra.mxu0 0
  %481 = vmatprep.subr.bf16.mxu0 0
  %482 = vmatpush2.bf16.msra.mxu0 0
  %483 = vmatprep.subr.bf16.mxu0 0
  %484 = vmatpush2.bf16.msra.mxu0 0
  %485 = vmatprep.subr.bf16.mxu0 0
  %486 = vmatpush2.bf16.msra.mxu0 0
  %487 = vmatprep.subr.bf16.mxu0 0
  %488 = vmatpush2.bf16.msra.mxu0 0
  %489 = vmatprep.mubr.bf16.mxu0 0
  %490 = vmatmul.mubr.bf16.gmra.mxu0 %v236
  %v491 = vpop.f32.mrf.mxu0
  %v492 = vadd.f32 0.0, %v491
  %v493 = vpop.f32.mrf.mxu0
  %v494 = vpop.f32.mrf.mxu0
  %v495 = vadd.f32 0.0, %v494
  %v496 = vpop.f32.mrf.mxu0
  %497 = vmatprep.mubr.bf16.mxu0 0
  %498 = vmatmul.mubr.bf16.gmra.mxu0 %v239
  %v499 = vpop.f32.mrf.mxu0
  %v500 = vadd.f32 0.0, %v499
  %v501 = vpop.f32.mrf.mxu0
  %v502 = vpop.f32.mrf.mxu0
  %v503 = vadd.f32 0.0, %v502
  %v504 = vpop.f32.mrf.mxu0
  %505 = vmatprep.mubr.bf16.mxu0 0
  %506 = vmatmul.mubr.bf16.gmra.mxu0 %v242
  %v507 = vpop.f32.mrf.mxu0
  %v508 = vadd.f32 0.0, %v507
  %v509 = vpop.f32.mrf.mxu0
  %v510 = vpop.f32.mrf.mxu0
  %v511 = vadd.f32 0.0, %v510
  %v512 = vpop.f32.mrf.mxu0
  %513 = vmatprep.mubr.bf16.mxu0 0
  %514 = vmatmul.mubr.bf16.gmra.mxu0 %v245
  %v515 = vpop.f32.mrf.mxu0
  %v516 = vadd.f32 0.0, %v515
  %v517 = vpop.f32.mrf.mxu0
  %v518 = vpop.f32.mrf.mxu0
  %v519 = vadd.f32 0.0, %v518
  %v520 = vpop.f32.mrf.mxu0
  %521 = vdwg.mxu0
  %v522 = vpack.c.bf16 %v495, %v492
  %v523 = vpack.c.bf16 %v503, %v500
  %v524 = vpack.c.bf16 %v511, %v508
  %v525 = vpack.c.bf16 %v519, %v516
  %v530 = vunpack.c.l.b16 %v522
  %v531 = vunpack.c.h.b16 %v522
  %v532 = vunpack.c.l.b16 %v523
  %v533 = vunpack.c.h.b16 %v523
  %v534 = vunpack.c.l.b16 %v524
  %v535 = vunpack.c.h.b16 %v524
  %v536 = vunpack.c.l.b16 %v525
  %v537 = vunpack.c.h.b16 %v525
  %v538 = vpack.c.b16 %v530, %v530
  %v539 = vpack.c.b16 %v531, %v531
  %v540 = vpack.c.b16 %v532, %v532
  %v541 = vpack.c.b16 %v533, %v533
  %v542 = vpack.c.b16 %v534, %v534
  %v543 = vpack.c.b16 %v535, %v535
  %v544 = vpack.c.b16 %v536, %v536
  %v545 = vpack.c.b16 %v537, %v537
  %554 = vst [vmem:[#allocation2 + $0xc] sm:$0xf] %v538
  %555 = vst [vmem:[#allocation2 + $0x1c] sm:$0xf] %v539
  %556 = vst [vmem:[#allocation2 + $0x2c] sm:$0xf] %v540
  %557 = vst [vmem:[#allocation2 + $0x3c] sm:$0xf] %v541
  %558 = vst [vmem:[#allocation2 + $0x4c] sm:$0xf] %v542
  %559 = vst [vmem:[#allocation2 + $0x5c] sm:$0xf] %v543
  %560 = vst [vmem:[#allocation2 + $0x6c] sm:$0xf] %v544
  %561 = vst [vmem:[#allocation2 + $0x7c] sm:$0xf] %v545
  %v562 = vld [vmem:[#allocation2] sm:$0xff]
  %v563 = vld [vmem:[#allocation2 + $0x8] sm:$0xff]
  %v564 = vld [vmem:[#allocation2 + $0x10] sm:$0xff]
  %v565 = vld [vmem:[#allocation2 + $0x18] sm:$0xff]
  %v566 = vld [vmem:[#allocation2 + $0x20] sm:$0xff]
  %v567 = vld [vmem:[#allocation2 + $0x28] sm:$0xff]
  %v568 = vld [vmem:[#allocation2 + $0x30] sm:$0xff]
  %v569 = vld [vmem:[#allocation2 + $0x38] sm:$0xff]
  %v570 = vld [vmem:[#allocation2 + $0x40] sm:$0xff]
  %v571 = vld [vmem:[#allocation2 + $0x48] sm:$0xff]
  %v572 = vld [vmem:[#allocation2 + $0x50] sm:$0xff]
  %v573 = vld [vmem:[#allocation2 + $0x58] sm:$0xff]
  %v574 = vld [vmem:[#allocation2 + $0x60] sm:$0xff]
  %v575 = vld [vmem:[#allocation2 + $0x68] sm:$0xff]
  %v576 = vld [vmem:[#allocation2 + $0x70] sm:$0xff]
  %v577 = vld [vmem:[#allocation2 + $0x78] sm:$0xff]
  %v578 = vld [vmem:[%s4] sm:$0xf]
  %v579 = vld [vmem:[%s4 + $0x4] sm:$0xf]
  %v580 = vld [vmem:[%s4 + $0x8] sm:$0xf]
  %v581 = vld [vmem:[%s4 + $0xc] sm:$0xf]
  %v582 = vld [vmem:[%s4 + $0x10] sm:$0xf]
  %v583 = vld [vmem:[%s4 + $0x14] sm:$0xf]
  %v584 = vld [vmem:[%s4 + $0x18] sm:$0xf]
  %v585 = vld [vmem:[%s4 + $0x1c] sm:$0xf]
  %v586 = vld [vmem:[%s4 + $0x20] sm:$0xf]
  %v587 = vld [vmem:[%s4 + $0x24] sm:$0xf]
  %v588 = vld [vmem:[%s4 + $0x28] sm:$0xf]
  %v589 = vld [vmem:[%s4 + $0x2c] sm:$0xf]
  %v590 = vld [vmem:[%s4 + $0x30] sm:$0xf]
  %v591 = vld [vmem:[%s4 + $0x34] sm:$0xf]
  %v592 = vld [vmem:[%s4 + $0x38] sm:$0xf]
  %v593 = vld [vmem:[%s4 + $0x3c] sm:$0xf]
  %v594 = vld [vmem:[%s4 + $0x40] sm:$0xf]
  %v595 = vld [vmem:[%s4 + $0x44] sm:$0xf]
  %v596 = vld [vmem:[%s4 + $0x48] sm:$0xf]
  %v597 = vld [vmem:[%s4 + $0x4c] sm:$0xf]
  %v598 = vld [vmem:[%s4 + $0x50] sm:$0xf]
  %v599 = vld [vmem:[%s4 + $0x54] sm:$0xf]
  %v600 = vld [vmem:[%s4 + $0x58] sm:$0xf]
  %v601 = vld [vmem:[%s4 + $0x5c] sm:$0xf]
  %v602 = vld [vmem:[%s4 + $0x60] sm:$0xf]
  %v603 = vld [vmem:[%s4 + $0x64] sm:$0xf]
  %v604 = vld [vmem:[%s4 + $0x68] sm:$0xf]
  %v605 = vld [vmem:[%s4 + $0x6c] sm:$0xf]
  %v606 = vld [vmem:[%s4 + $0x70] sm:$0xf]
  %v607 = vld [vmem:[%s4 + $0x74] sm:$0xf]
  %v608 = vld [vmem:[%s4 + $0x78] sm:$0xf]
  %v609 = vld [vmem:[%s4 + $0x7c] sm:$0xf]
  %v610 = vld [vmem:[%s4 + $0x80] sm:$0xf]
  %v611 = vld [vmem:[%s4 + $0x84] sm:$0xf]
  %v612 = vld [vmem:[%s4 + $0x88] sm:$0xf]
  %v613 = vld [vmem:[%s4 + $0x8c] sm:$0xf]
  %v614 = vld [vmem:[%s4 + $0x90] sm:$0xf]
  %v615 = vld [vmem:[%s4 + $0x94] sm:$0xf]
  %v616 = vld [vmem:[%s4 + $0x98] sm:$0xf]
  %v617 = vld [vmem:[%s4 + $0x9c] sm:$0xf]
  %v618 = vld [vmem:[%s4 + $0xa0] sm:$0xf]
  %v619 = vld [vmem:[%s4 + $0xa4] sm:$0xf]
  %v620 = vld [vmem:[%s4 + $0xa8] sm:$0xf]
  %v621 = vld [vmem:[%s4 + $0xac] sm:$0xf]
  %v622 = vld [vmem:[%s4 + $0xb0] sm:$0xf]
  %v623 = vld [vmem:[%s4 + $0xb4] sm:$0xf]
  %v624 = vld [vmem:[%s4 + $0xb8] sm:$0xf]
  %v625 = vld [vmem:[%s4 + $0xbc] sm:$0xf]
  %v626 = vld [vmem:[%s4 + $0xc0] sm:$0xf]
  %v627 = vld [vmem:[%s4 + $0xc4] sm:$0xf]
  %v628 = vld [vmem:[%s4 + $0xc8] sm:$0xf]
  %v629 = vld [vmem:[%s4 + $0xcc] sm:$0xf]
  %v630 = vld [vmem:[%s4 + $0xd0] sm:$0xf]
  %v631 = vld [vmem:[%s4 + $0xd4] sm:$0xf]
  %v632 = vld [vmem:[%s4 + $0xd8] sm:$0xf]
  %v633 = vld [vmem:[%s4 + $0xdc] sm:$0xf]
  %v634 = vld [vmem:[%s4 + $0xe0] sm:$0xf]
  %v635 = vld [vmem:[%s4 + $0xe4] sm:$0xf]
  %v636 = vld [vmem:[%s4 + $0xe8] sm:$0xf]
  %v637 = vld [vmem:[%s4 + $0xec] sm:$0xf]
  %v638 = vld [vmem:[%s4 + $0xf0] sm:$0xf]
  %v639 = vld [vmem:[%s4 + $0xf4] sm:$0xf]
  %v640 = vld [vmem:[%s4 + $0xf8] sm:$0xf]
  %v641 = vld [vmem:[%s4 + $0xfc] sm:$0xf]
  %v642 = vld [vmem:[%s5] sm:$0x1]
  %v644 = vlaneseq
  %v645 = vshrl.u32 %v644, 7
  %v646 = vsub.s32 0, %v645
  %v647 = vrot.slane %v642, %v646
  %v665 = vunpack.c.l.b16 %v562
  %v666 = vunpack.c.h.b16 %v562
  %v667 = vunpack.c.l.b16 %v563
  %v668 = vunpack.c.h.b16 %v563
  %v669 = vunpack.c.l.b16 %v564
  %v670 = vunpack.c.h.b16 %v564
  %v671 = vunpack.c.l.b16 %v565
  %v672 = vunpack.c.h.b16 %v565
  %v673 = vunpack.c.l.b16 %v566
  %v674 = vunpack.c.h.b16 %v566
  %v675 = vunpack.c.l.b16 %v567
  %v676 = vunpack.c.h.b16 %v567
  %v677 = vunpack.c.l.b16 %v568
  %v678 = vunpack.c.h.b16 %v568
  %v679 = vunpack.c.l.b16 %v569
  %v680 = vunpack.c.h.b16 %v569
  %v681 = vunpack.c.l.b16 %v570
  %v682 = vunpack.c.h.b16 %v570
  %v683 = vunpack.c.l.b16 %v571
  %v684 = vunpack.c.h.b16 %v571
  %v685 = vunpack.c.l.b16 %v572
  %v686 = vunpack.c.h.b16 %v572
  %v687 = vunpack.c.l.b16 %v573
  %v688 = vunpack.c.h.b16 %v573
  %v689 = vunpack.c.l.b16 %v574
  %v690 = vunpack.c.h.b16 %v574
  %v691 = vunpack.c.l.b16 %v575
  %v692 = vunpack.c.h.b16 %v575
  %v693 = vunpack.c.l.b16 %v576
  %v694 = vunpack.c.h.b16 %v576
  %v695 = vunpack.c.l.b16 %v577
  %v696 = vunpack.c.h.b16 %v577
  %v697 = vpack.c.b16 %v669, %v665
  %v698 = vpack.c.b16 %v670, %v666
  %v699 = vpack.c.b16 %v671, %v667
  %v700 = vpack.c.b16 %v672, %v668
  %v701 = vpack.c.b16 %v677, %v673
  %v702 = vpack.c.b16 %v678, %v674
  %v703 = vpack.c.b16 %v679, %v675
  %v704 = vpack.c.b16 %v680, %v676
  %v705 = vpack.c.b16 %v685, %v681
  %v706 = vpack.c.b16 %v686, %v682
  %v707 = vpack.c.b16 %v687, %v683
  %v708 = vpack.c.b16 %v688, %v684
  %v709 = vpack.c.b16 %v693, %v689
  %v710 = vpack.c.b16 %v694, %v690
  %v711 = vpack.c.b16 %v695, %v691
  %v712 = vpack.c.b16 %v696, %v692
  %v793 = vunpack.c.l.b16 %v578
  %v794 = vunpack.c.l.b16 %v579
  %v795 = vunpack.c.l.b16 %v580
  %v796 = vunpack.c.l.b16 %v581
  %v797 = vunpack.c.l.b16 %v582
  %v798 = vunpack.c.l.b16 %v583
  %v799 = vunpack.c.l.b16 %v584
  %v800 = vunpack.c.l.b16 %v585
  %v801 = vunpack.c.l.b16 %v586
  %v802 = vunpack.c.l.b16 %v587
  %v803 = vunpack.c.l.b16 %v588
  %v804 = vunpack.c.l.b16 %v589
  %v805 = vunpack.c.l.b16 %v590
  %v806 = vunpack.c.l.b16 %v591
  %v807 = vunpack.c.l.b16 %v592
  %v808 = vunpack.c.l.b16 %v593
  %v809 = vunpack.c.l.b16 %v594
  %v810 = vunpack.c.l.b16 %v595
  %v811 = vunpack.c.l.b16 %v596
  %v812 = vunpack.c.l.b16 %v597
  %v813 = vunpack.c.l.b16 %v598
  %v814 = vunpack.c.l.b16 %v599
  %v815 = vunpack.c.l.b16 %v600
  %v816 = vunpack.c.l.b16 %v601
  %v817 = vunpack.c.l.b16 %v602
  %v818 = vunpack.c.l.b16 %v603
  %v819 = vunpack.c.l.b16 %v604
  %v820 = vunpack.c.l.b16 %v605
  %v821 = vunpack.c.l.b16 %v606
  %v822 = vunpack.c.l.b16 %v607
  %v823 = vunpack.c.l.b16 %v608
  %v824 = vunpack.c.l.b16 %v609
  %v825 = vunpack.c.l.b16 %v610
  %v826 = vunpack.c.l.b16 %v611
  %v827 = vunpack.c.l.b16 %v612
  %v828 = vunpack.c.l.b16 %v613
  %v829 = vunpack.c.l.b16 %v614
  %v830 = vunpack.c.l.b16 %v615
  %v831 = vunpack.c.l.b16 %v616
  %v832 = vunpack.c.l.b16 %v617
  %v833 = vunpack.c.l.b16 %v618
  %v834 = vunpack.c.l.b16 %v619
  %v835 = vunpack.c.l.b16 %v620
  %v836 = vunpack.c.l.b16 %v621
  %v837 = vunpack.c.l.b16 %v622
  %v838 = vunpack.c.l.b16 %v623
  %v839 = vunpack.c.l.b16 %v624
  %v840 = vunpack.c.l.b16 %v625
  %v841 = vunpack.c.l.b16 %v626
  %v842 = vunpack.c.l.b16 %v627
  %v843 = vunpack.c.l.b16 %v628
  %v844 = vunpack.c.l.b16 %v629
  %v845 = vunpack.c.l.b16 %v630
  %v846 = vunpack.c.l.b16 %v631
  %v847 = vunpack.c.l.b16 %v632
  %v848 = vunpack.c.l.b16 %v633
  %v849 = vunpack.c.l.b16 %v634
  %v850 = vunpack.c.l.b16 %v635
  %v851 = vunpack.c.l.b16 %v636
  %v852 = vunpack.c.l.b16 %v637
  %v853 = vunpack.c.l.b16 %v638
  %v854 = vunpack.c.l.b16 %v639
  %v855 = vunpack.c.l.b16 %v640
  %v856 = vunpack.c.l.b16 %v641
  %v857 = vpack.c.b16 %v794, %v793
  %v858 = vpack.c.b16 %v796, %v795
  %v859 = vpack.c.b16 %v798, %v797
  %v860 = vpack.c.b16 %v800, %v799
  %v861 = vpack.c.b16 %v802, %v801
  %v862 = vpack.c.b16 %v804, %v803
  %v863 = vpack.c.b16 %v806, %v805
  %v864 = vpack.c.b16 %v808, %v807
  %v865 = vpack.c.b16 %v810, %v809
  %v866 = vpack.c.b16 %v812, %v811
  %v867 = vpack.c.b16 %v814, %v813
  %v868 = vpack.c.b16 %v816, %v815
  %v869 = vpack.c.b16 %v818, %v817
  %v870 = vpack.c.b16 %v820, %v819
  %v871 = vpack.c.b16 %v822, %v821
  %v872 = vpack.c.b16 %v824, %v823
  %v873 = vpack.c.b16 %v826, %v825
  %v874 = vpack.c.b16 %v828, %v827
  %v875 = vpack.c.b16 %v830, %v829
  %v876 = vpack.c.b16 %v832, %v831
  %v877 = vpack.c.b16 %v834, %v833
  %v878 = vpack.c.b16 %v836, %v835
  %v879 = vpack.c.b16 %v838, %v837
  %v880 = vpack.c.b16 %v840, %v839
  %v881 = vpack.c.b16 %v842, %v841
  %v882 = vpack.c.b16 %v844, %v843
  %v883 = vpack.c.b16 %v846, %v845
  %v884 = vpack.c.b16 %v848, %v847
  %v885 = vpack.c.b16 %v850, %v849
  %v886 = vpack.c.b16 %v852, %v851
  %v887 = vpack.c.b16 %v854, %v853
  %v888 = vpack.c.b16 %v856, %v855
  %921 = vmatprep.subr.bf16.mxu0 0
  %922 = vmatpush1.bf16.msra.mxu0 %v864
  %923 = vmatprep.subr.bf16.mxu0 0
  %924 = vmatpush1.bf16.msra.mxu0 %v863
  %925 = vmatprep.subr.bf16.mxu0 0
  %926 = vmatpush1.bf16.msra.mxu0 %v862
  %927 = vmatprep.subr.bf16.mxu0 0
  %928 = vmatpush1.bf16.msra.mxu0 %v861
  %929 = vmatprep.subr.bf16.mxu0 0
  %930 = vmatpush1.bf16.msra.mxu0 %v860
  %931 = vmatprep.subr.bf16.mxu0 0
  %932 = vmatpush1.bf16.msra.mxu0 %v859
  %933 = vmatprep.subr.bf16.mxu0 0
  %934 = vmatpush1.bf16.msra.mxu0 %v858
  %935 = vmatprep.subr.bf16.mxu0 0
  %936 = vmatpush1.bf16.msra.mxu0 %v857
  %937 = vmatprep.subr.bf16.mxu0 0
  %938 = vmatpush2.bf16.msra.mxu0 %v872
  %939 = vmatprep.subr.bf16.mxu0 0
  %940 = vmatpush2.bf16.msra.mxu0 %v871
  %941 = vmatprep.subr.bf16.mxu0 0
  %942 = vmatpush2.bf16.msra.mxu0 %v870
  %943 = vmatprep.subr.bf16.mxu0 0
  %944 = vmatpush2.bf16.msra.mxu0 %v869
  %945 = vmatprep.subr.bf16.mxu0 0
  %946 = vmatpush2.bf16.msra.mxu0 %v868
  %947 = vmatprep.subr.bf16.mxu0 0
  %948 = vmatpush2.bf16.msra.mxu0 %v867
  %949 = vmatprep.subr.bf16.mxu0 0
  %950 = vmatpush2.bf16.msra.mxu0 %v866
  %951 = vmatprep.subr.bf16.mxu0 0
  %952 = vmatpush2.bf16.msra.mxu0 %v865
  %953 = vmatprep.mubr.bf16.mxu0 %v698
  %954 = vmatmul.mubr.bf16.gmra.mxu0 %v697
  %v955 = vpop.f32.mrf.mxu0
  %v956 = vadd.f32 %v647, %v955
  %v957 = vpop.f32.mrf.mxu0
  %v958 = vpop.f32.mrf.mxu0
  %v959 = vadd.f32 %v647, %v958
  %v960 = vpop.f32.mrf.mxu0
  %961 = vmatprep.mubr.bf16.mxu0 %v702
  %962 = vmatmul.mubr.bf16.gmra.mxu0 %v701
  %v963 = vpop.f32.mrf.mxu0
  %v964 = vadd.f32 %v647, %v963
  %v965 = vpop.f32.mrf.mxu0
  %v966 = vpop.f32.mrf.mxu0
  %v967 = vadd.f32 %v647, %v966
  %v968 = vpop.f32.mrf.mxu0
  %969 = vmatprep.mubr.bf16.mxu0 %v706
  %970 = vmatmul.mubr.bf16.gmra.mxu0 %v705
  %v971 = vpop.f32.mrf.mxu0
  %v972 = vadd.f32 %v647, %v971
  %v973 = vpop.f32.mrf.mxu0
  %v974 = vpop.f32.mrf.mxu0
  %v975 = vadd.f32 %v647, %v974
  %v976 = vpop.f32.mrf.mxu0
  %977 = vmatprep.mubr.bf16.mxu0 %v710
  %978 = vmatmul.mubr.bf16.gmra.mxu0 %v709
  %v979 = vpop.f32.mrf.mxu0
  %v980 = vadd.f32 %v647, %v979
  %v981 = vpop.f32.mrf.mxu0
  %v982 = vpop.f32.mrf.mxu0
  %v983 = vadd.f32 %v647, %v982
  %v984 = vpop.f32.mrf.mxu0
  %985 = vdwg.mxu0
  %986 = vmatprep.subr.bf16.mxu0 0
  %987 = vmatpush1.bf16.msra.mxu0 %v880
  %988 = vmatprep.subr.bf16.mxu0 0
  %989 = vmatpush1.bf16.msra.mxu0 %v879
  %990 = vmatprep.subr.bf16.mxu0 0
  %991 = vmatpush1.bf16.msra.mxu0 %v878
  %992 = vmatprep.subr.bf16.mxu0 0
  %993 = vmatpush1.bf16.msra.mxu0 %v877
  %994 = vmatprep.subr.bf16.mxu0 0
  %995 = vmatpush1.bf16.msra.mxu0 %v876
  %996 = vmatprep.subr.bf16.mxu0 0
  %997 = vmatpush1.bf16.msra.mxu0 %v875
  %998 = vmatprep.subr.bf16.mxu0 0
  %999 = vmatpush1.bf16.msra.mxu0 %v874
  %1000 = vmatprep.subr.bf16.mxu0 0
  %1001 = vmatpush1.bf16.msra.mxu0 %v873
  %1002 = vmatprep.subr.bf16.mxu0 0
  %1003 = vmatpush2.bf16.msra.mxu0 %v888
  %1004 = vmatprep.subr.bf16.mxu0 0
  %1005 = vmatpush2.bf16.msra.mxu0 %v887
  %1006 = vmatprep.subr.bf16.mxu0 0
  %1007 = vmatpush2.bf16.msra.mxu0 %v886
  %1008 = vmatprep.subr.bf16.mxu0 0
  %1009 = vmatpush2.bf16.msra.mxu0 %v885
  %1010 = vmatprep.subr.bf16.mxu0 0
  %1011 = vmatpush2.bf16.msra.mxu0 %v884
  %1012 = vmatprep.subr.bf16.mxu0 0
  %1013 = vmatpush2.bf16.msra.mxu0 %v883
  %1014 = vmatprep.subr.bf16.mxu0 0
  %1015 = vmatpush2.bf16.msra.mxu0 %v882
  %1016 = vmatprep.subr.bf16.mxu0 0
  %1017 = vmatpush2.bf16.msra.mxu0 %v881
  %1018 = vmatprep.mubr.bf16.mxu0 %v700
  %1019 = vmatmul.mubr.bf16.gmra.mxu0 %v699
  %v1020 = vpop.f32.mrf.mxu0
  %v1021 = vadd.f32 %v956, %v1020
  %v1022 = vpop.f32.mrf.mxu0
  %v1023 = vpop.f32.mrf.mxu0
  %v1024 = vadd.f32 %v959, %v1023
  %v1025 = vpop.f32.mrf.mxu0
  %1026 = vmatprep.mubr.bf16.mxu0 %v704
  %1027 = vmatmul.mubr.bf16.gmra.mxu0 %v703
  %v1028 = vpop.f32.mrf.mxu0
  %v1029 = vadd.f32 %v964, %v1028
  %v1030 = vpop.f32.mrf.mxu0
  %v1031 = vpop.f32.mrf.mxu0
  %v1032 = vadd.f32 %v967, %v1031
  %v1033 = vpop.f32.mrf.mxu0
  %1034 = vmatprep.mubr.bf16.mxu0 %v708
  %1035 = vmatmul.mubr.bf16.gmra.mxu0 %v707
  %v1036 = vpop.f32.mrf.mxu0
  %v1037 = vadd.f32 %v972, %v1036
  %v1038 = vpop.f32.mrf.mxu0
  %v1039 = vpop.f32.mrf.mxu0
  %v1040 = vadd.f32 %v975, %v1039
  %v1041 = vpop.f32.mrf.mxu0
  %1042 = vmatprep.mubr.bf16.mxu0 %v712
  %1043 = vmatmul.mubr.bf16.gmra.mxu0 %v711
  %v1044 = vpop.f32.mrf.mxu0
  %v1045 = vadd.f32 %v980, %v1044
  %v1046 = vpop.f32.mrf.mxu0
  %v1047 = vpop.f32.mrf.mxu0
  %v1048 = vadd.f32 %v983, %v1047
  %v1049 = vpop.f32.mrf.mxu0
  %1050 = vdwg.mxu0
  %v1051 = vmax.f32 %v1021, 0.0
  %v1052 = vmax.f32 %v1024, 0.0
  %v1053 = vmax.f32 %v1029, 0.0
  %v1054 = vmax.f32 %v1032, 0.0
  %v1055 = vmax.f32 %v1037, 0.0
  %v1056 = vmax.f32 %v1040, 0.0
  %v1057 = vmax.f32 %v1045, 0.0
  %v1058 = vmax.f32 %v1048, 0.0
  %v1059 = vpack.c.bf16 %v1052, %v1051
  %v1060 = vpack.c.bf16 %v1054, %v1053
  %v1061 = vpack.c.bf16 %v1056, %v1055
  %v1062 = vpack.c.bf16 %v1058, %v1057
  %v1067 = vunpack.c.l.b16 %v1059
  %v1068 = vunpack.c.h.b16 %v1059
  %v1069 = vunpack.c.l.b16 %v1060
  %v1070 = vunpack.c.h.b16 %v1060
  %v1071 = vunpack.c.l.b16 %v1061
  %v1072 = vunpack.c.h.b16 %v1061
  %v1073 = vunpack.c.l.b16 %v1062
  %v1074 = vunpack.c.h.b16 %v1062
  %v1075 = vpack.c.b16 %v1067, %v1067
  %v1076 = vpack.c.b16 %v1068, %v1068
  %v1077 = vpack.c.b16 %v1069, %v1069
  %v1078 = vpack.c.b16 %v1070, %v1070
  %v1079 = vpack.c.b16 %v1071, %v1071
  %v1080 = vpack.c.b16 %v1072, %v1072
  %v1081 = vpack.c.b16 %v1073, %v1073
  %v1082 = vpack.c.b16 %v1074, %v1074
  %1091 = vst [vmem:[#allocation2] sm:$0xf] %v1075
  %1092 = vst [vmem:[#allocation2 + $0x10] sm:$0xf] %v1076
  %1093 = vst [vmem:[#allocation2 + $0x20] sm:$0xf] %v1077
  %1094 = vst [vmem:[#allocation2 + $0x30] sm:$0xf] %v1078
  %1095 = vst [vmem:[#allocation2 + $0x40] sm:$0xf] %v1079
  %1096 = vst [vmem:[#allocation2 + $0x50] sm:$0xf] %v1080
  %1097 = vst [vmem:[#allocation2 + $0x60] sm:$0xf] %v1081
  %1098 = vst [vmem:[#allocation2 + $0x70] sm:$0xf] %v1082
  %1099 = vmatprep.subr.bf16.mxu0 0
  %1100 = vmatpush1.bf16.msra.mxu0 0
  %1101 = vmatprep.subr.bf16.mxu0 0
  %1102 = vmatpush1.bf16.msra.mxu0 0
  %1103 = vmatprep.subr.bf16.mxu0 0
  %1104 = vmatpush1.bf16.msra.mxu0 0
  %1105 = vmatprep.subr.bf16.mxu0 0
  %1106 = vmatpush1.bf16.msra.mxu0 0
  %1107 = vmatprep.subr.bf16.mxu0 0
  %1108 = vmatpush1.bf16.msra.mxu0 %v1062
  %1109 = vmatprep.subr.bf16.mxu0 0
  %1110 = vmatpush1.bf16.msra.mxu0 %v1061
  %1111 = vmatprep.subr.bf16.mxu0 0
  %1112 = vmatpush1.bf16.msra.mxu0 %v1060
  %1113 = vmatprep.subr.bf16.mxu0 0
  %1114 = vmatpush1.bf16.msra.mxu0 %v1059
  %1115 = vmatprep.subr.bf16.mxu0 0
  %1116 = vmatpush2.bf16.msra.mxu0 0
  %1117 = vmatprep.subr.bf16.mxu0 0
  %1118 = vmatpush2.bf16.msra.mxu0 0
  %1119 = vmatprep.subr.bf16.mxu0 0
  %1120 = vmatpush2.bf16.msra.mxu0 0
  %1121 = vmatprep.subr.bf16.mxu0 0
  %1122 = vmatpush2.bf16.msra.mxu0 0
  %1123 = vmatprep.subr.bf16.mxu0 0
  %1124 = vmatpush2.bf16.msra.mxu0 0
  %1125 = vmatprep.subr.bf16.mxu0 0
  %1126 = vmatpush2.bf16.msra.mxu0 0
  %1127 = vmatprep.subr.bf16.mxu0 0
  %1128 = vmatpush2.bf16.msra.mxu0 0
  %1129 = vmatprep.subr.bf16.mxu0 0
  %1130 = vmatpush2.bf16.msra.mxu0 0
  %1131 = vmatprep.mubr.bf16.mxu0 0
  %1132 = vmatmul.mubr.bf16.gmra.mxu0 %v236
  %v1133 = vpop.f32.mrf.mxu0
  %v1134 = vadd.f32 0.0, %v1133
  %v1135 = vpop.f32.mrf.mxu0
  %v1136 = vpop.f32.mrf.mxu0
  %v1137 = vadd.f32 0.0, %v1136
  %v1138 = vpop.f32.mrf.mxu0
  %1139 = vmatprep.mubr.bf16.mxu0 0
  %1140 = vmatmul.mubr.bf16.gmra.mxu0 %v239
  %v1141 = vpop.f32.mrf.mxu0
  %v1142 = vadd.f32 0.0, %v1141
  %v1143 = vpop.f32.mrf.mxu0
  %v1144 = vpop.f32.mrf.mxu0
  %v1145 = vadd.f32 0.0, %v1144
  %v1146 = vpop.f32.mrf.mxu0
  %1147 = vmatprep.mubr.bf16.mxu0 0
  %1148 = vmatmul.mubr.bf16.gmra.mxu0 %v242
  %v1149 = vpop.f32.mrf.mxu0
  %v1150 = vadd.f32 0.0, %v1149
  %v1151 = vpop.f32.mrf.mxu0
  %v1152 = vpop.f32.mrf.mxu0
  %v1153 = vadd.f32 0.0, %v1152
  %v1154 = vpop.f32.mrf.mxu0
  %1155 = vmatprep.mubr.bf16.mxu0 0
  %1156 = vmatmul.mubr.bf16.gmra.mxu0 %v245
  %v1157 = vpop.f32.mrf.mxu0
  %v1158 = vadd.f32 0.0, %v1157
  %v1159 = vpop.f32.mrf.mxu0
  %v1160 = vpop.f32.mrf.mxu0
  %v1161 = vadd.f32 0.0, %v1160
  %v1162 = vpop.f32.mrf.mxu0
  %1163 = vdwg.mxu0
  %v1164 = vpack.c.bf16 %v1137, %v1134
  %v1165 = vpack.c.bf16 %v1145, %v1142
  %v1166 = vpack.c.bf16 %v1153, %v1150
  %v1167 = vpack.c.bf16 %v1161, %v1158
  %v1172 = vunpack.c.l.b16 %v1164
  %v1173 = vunpack.c.h.b16 %v1164
  %v1174 = vunpack.c.l.b16 %v1165
  %v1175 = vunpack.c.h.b16 %v1165
  %v1176 = vunpack.c.l.b16 %v1166
  %v1177 = vunpack.c.h.b16 %v1166
  %v1178 = vunpack.c.l.b16 %v1167
  %v1179 = vunpack.c.h.b16 %v1167
  %v1180 = vpack.c.b16 %v1172, %v1172
  %v1181 = vpack.c.b16 %v1173, %v1173
  %v1182 = vpack.c.b16 %v1174, %v1174
  %v1183 = vpack.c.b16 %v1175, %v1175
  %v1184 = vpack.c.b16 %v1176, %v1176
  %v1185 = vpack.c.b16 %v1177, %v1177
  %v1186 = vpack.c.b16 %v1178, %v1178
  %v1187 = vpack.c.b16 %v1179, %v1179
  %1196 = vst [vmem:[#allocation2 + $0x4] sm:$0xf] %v1180
  %1197 = vst [vmem:[#allocation2 + $0x14] sm:$0xf] %v1181
  %1198 = vst [vmem:[#allocation2 + $0x24] sm:$0xf] %v1182
  %1199 = vst [vmem:[#allocation2 + $0x34] sm:$0xf] %v1183
  %1200 = vst [vmem:[#allocation2 + $0x44] sm:$0xf] %v1184
  %1201 = vst [vmem:[#allocation2 + $0x54] sm:$0xf] %v1185
  %1202 = vst [vmem:[#allocation2 + $0x64] sm:$0xf] %v1186
  %1203 = vst [vmem:[#allocation2 + $0x74] sm:$0xf] %v1187
  %1204 = vmatprep.subr.bf16.mxu0 0
  %1205 = vmatpush1.bf16.msra.mxu0 0
  %1206 = vmatprep.subr.bf16.mxu0 0
  %1207 = vmatpush1.bf16.msra.mxu0 0
  %1208 = vmatprep.subr.bf16.mxu0 0
  %1209 = vmatpush1.bf16.msra.mxu0 0
  %1210 = vmatprep.subr.bf16.mxu0 0
  %1211 = vmatpush1.bf16.msra.mxu0 0
  %1212 = vmatprep.subr.bf16.mxu0 0
  %1213 = vmatpush1.bf16.msra.mxu0 %v1167
  %1214 = vmatprep.subr.bf16.mxu0 0
  %1215 = vmatpush1.bf16.msra.mxu0 %v1166
  %1216 = vmatprep.subr.bf16.mxu0 0
  %1217 = vmatpush1.bf16.msra.mxu0 %v1165
  %1218 = vmatprep.subr.bf16.mxu0 0
  %1219 = vmatpush1.bf16.msra.mxu0 %v1164
  %1220 = vmatprep.subr.bf16.mxu0 0
  %1221 = vmatpush2.bf16.msra.mxu0 0
  %1222 = vmatprep.subr.bf16.mxu0 0
  %1223 = vmatpush2.bf16.msra.mxu0 0
  %1224 = vmatprep.subr.bf16.mxu0 0
  %1225 = vmatpush2.bf16.msra.mxu0 0
  %1226 = vmatprep.subr.bf16.mxu0 0
  %1227 = vmatpush2.bf16.msra.mxu0 0
  %1228 = vmatprep.subr.bf16.mxu0 0
  %1229 = vmatpush2.bf16.msra.mxu0 0
  %1230 = vmatprep.subr.bf16.mxu0 0
  %1231 = vmatpush2.bf16.msra.mxu0 0
  %1232 = vmatprep.subr.bf16.mxu0 0
  %1233 = vmatpush2.bf16.msra.mxu0 0
  %1234 = vmatprep.subr.bf16.mxu0 0
  %1235 = vmatpush2.bf16.msra.mxu0 0
  %1236 = vmatprep.mubr.bf16.mxu0 0
  %1237 = vmatmul.mubr.bf16.gmra.mxu0 %v236
  %v1238 = vpop.f32.mrf.mxu0
  %v1239 = vadd.f32 0.0, %v1238
  %v1240 = vpop.f32.mrf.mxu0
  %v1241 = vpop.f32.mrf.mxu0
  %v1242 = vadd.f32 0.0, %v1241
  %v1243 = vpop.f32.mrf.mxu0
  %1244 = vmatprep.mubr.bf16.mxu0 0
  %1245 = vmatmul.mubr.bf16.gmra.mxu0 %v239
  %v1246 = vpop.f32.mrf.mxu0
  %v1247 = vadd.f32 0.0, %v1246
  %v1248 = vpop.f32.mrf.mxu0
  %v1249 = vpop.f32.mrf.mxu0
  %v1250 = vadd.f32 0.0, %v1249
  %v1251 = vpop.f32.mrf.mxu0
  %1252 = vmatprep.mubr.bf16.mxu0 0
  %1253 = vmatmul.mubr.bf16.gmra.mxu0 %v242
  %v1254 = vpop.f32.mrf.mxu0
  %v1255 = vadd.f32 0.0, %v1254
  %v1256 = vpop.f32.mrf.mxu0
  %v1257 = vpop.f32.mrf.mxu0
  %v1258 = vadd.f32 0.0, %v1257
  %v1259 = vpop.f32.mrf.mxu0
  %1260 = vmatprep.mubr.bf16.mxu0 0
  %1261 = vmatmul.mubr.bf16.gmra.mxu0 %v245
  %v1262 = vpop.f32.mrf.mxu0
  %v1263 = vadd.f32 0.0, %v1262
  %v1264 = vpop.f32.mrf.mxu0
  %v1265 = vpop.f32.mrf.mxu0
  %v1266 = vadd.f32 0.0, %v1265
  %v1267 = vpop.f32.mrf.mxu0
  %1268 = vdwg.mxu0
  %v1269 = vpack.c.bf16 %v1242, %v1239
  %v1270 = vpack.c.bf16 %v1250, %v1247
  %v1271 = vpack.c.bf16 %v1258, %v1255
  %v1272 = vpack.c.bf16 %v1266, %v1263
  %v1277 = vunpack.c.l.b16 %v1269
  %v1278 = vunpack.c.h.b16 %v1269
  %v1279 = vunpack.c.l.b16 %v1270
  %v1280 = vunpack.c.h.b16 %v1270
  %v1281 = vunpack.c.l.b16 %v1271
  %v1282 = vunpack.c.h.b16 %v1271
  %v1283 = vunpack.c.l.b16 %v1272
  %v1284 = vunpack.c.h.b16 %v1272
  %v1285 = vpack.c.b16 %v1277, %v1277
  %v1286 = vpack.c.b16 %v1278, %v1278
  %v1287 = vpack.c.b16 %v1279, %v1279
  %v1288 = vpack.c.b16 %v1280, %v1280
  %v1289 = vpack.c.b16 %v1281, %v1281
  %v1290 = vpack.c.b16 %v1282, %v1282
  %v1291 = vpack.c.b16 %v1283, %v1283
  %v1292 = vpack.c.b16 %v1284, %v1284
  %1301 = vst [vmem:[#allocation2 + $0x8] sm:$0xf] %v1285
  %1302 = vst [vmem:[#allocation2 + $0x18] sm:$0xf] %v1286
  %1303 = vst [vmem:[#allocation2 + $0x28] sm:$0xf] %v1287
  %1304 = vst [vmem:[#allocation2 + $0x38] sm:$0xf] %v1288
  %1305 = vst [vmem:[#allocation2 + $0x48] sm:$0xf] %v1289
  %1306 = vst [vmem:[#allocation2 + $0x58] sm:$0xf] %v1290
  %1307 = vst [vmem:[#allocation2 + $0x68] sm:$0xf] %v1291
  %1308 = vst [vmem:[#allocation2 + $0x78] sm:$0xf] %v1292
  %1309 = vmatprep.subr.bf16.mxu0 0
  %1310 = vmatpush1.bf16.msra.mxu0 0
  %1311 = vmatprep.subr.bf16.mxu0 0
  %1312 = vmatpush1.bf16.msra.mxu0 0
  %1313 = vmatprep.subr.bf16.mxu0 0
  %1314 = vmatpush1.bf16.msra.mxu0 0
  %1315 = vmatprep.subr.bf16.mxu0 0
  %1316 = vmatpush1.bf16.msra.mxu0 0
  %1317 = vmatprep.subr.bf16.mxu0 0
  %1318 = vmatpush1.bf16.msra.mxu0 %v1272
  %1319 = vmatprep.subr.bf16.mxu0 0
  %1320 = vmatpush1.bf16.msra.mxu0 %v1271
  %1321 = vmatprep.subr.bf16.mxu0 0
  %1322 = vmatpush1.bf16.msra.mxu0 %v1270
  %1323 = vmatprep.subr.bf16.mxu0 0
  %1324 = vmatpush1.bf16.msra.mxu0 %v1269
  %1325 = vmatprep.subr.bf16.mxu0 0
  %1326 = vmatpush2.bf16.msra.mxu0 0
  %1327 = vmatprep.subr.bf16.mxu0 0
  %1328 = vmatpush2.bf16.msra.mxu0 0
  %1329 = vmatprep.subr.bf16.mxu0 0
  %1330 = vmatpush2.bf16.msra.mxu0 0
  %1331 = vmatprep.subr.bf16.mxu0 0
  %1332 = vmatpush2.bf16.msra.mxu0 0
  %1333 = vmatprep.subr.bf16.mxu0 0
  %1334 = vmatpush2.bf16.msra.mxu0 0
  %1335 = vmatprep.subr.bf16.mxu0 0
  %1336 = vmatpush2.bf16.msra.mxu0 0
  %1337 = vmatprep.subr.bf16.mxu0 0
  %1338 = vmatpush2.bf16.msra.mxu0 0
  %1339 = vmatprep.subr.bf16.mxu0 0
  %1340 = vmatpush2.bf16.msra.mxu0 0
  %1341 = vmatprep.mubr.bf16.mxu0 0
  %1342 = vmatmul.mubr.bf16.gmra.mxu0 %v236
  %v1343 = vpop.f32.mrf.mxu0
  %v1344 = vadd.f32 0.0, %v1343
  %v1345 = vpop.f32.mrf.mxu0
  %v1346 = vpop.f32.mrf.mxu0
  %v1347 = vadd.f32 0.0, %v1346
  %v1348 = vpop.f32.mrf.mxu0
  %1349 = vmatprep.mubr.bf16.mxu0 0
  %1350 = vmatmul.mubr.bf16.gmra.mxu0 %v239
  %v1351 = vpop.f32.mrf.mxu0
  %v1352 = vadd.f32 0.0, %v1351
  %v1353 = vpop.f32.mrf.mxu0
  %v1354 = vpop.f32.mrf.mxu0
  %v1355 = vadd.f32 0.0, %v1354
  %v1356 = vpop.f32.mrf.mxu0
  %1357 = vmatprep.mubr.bf16.mxu0 0
  %1358 = vmatmul.mubr.bf16.gmra.mxu0 %v242
  %v1359 = vpop.f32.mrf.mxu0
  %v1360 = vadd.f32 0.0, %v1359
  %v1361 = vpop.f32.mrf.mxu0
  %v1362 = vpop.f32.mrf.mxu0
  %v1363 = vadd.f32 0.0, %v1362
  %v1364 = vpop.f32.mrf.mxu0
  %1365 = vmatprep.mubr.bf16.mxu0 0
  %1366 = vmatmul.mubr.bf16.gmra.mxu0 %v245
  %v1367 = vpop.f32.mrf.mxu0
  %v1368 = vadd.f32 0.0, %v1367
  %v1369 = vpop.f32.mrf.mxu0
  %v1370 = vpop.f32.mrf.mxu0
  %v1371 = vadd.f32 0.0, %v1370
  %v1372 = vpop.f32.mrf.mxu0
  %1373 = vdwg.mxu0
  %v1374 = vpack.c.bf16 %v1347, %v1344
  %v1375 = vpack.c.bf16 %v1355, %v1352
  %v1376 = vpack.c.bf16 %v1363, %v1360
  %v1377 = vpack.c.bf16 %v1371, %v1368
  %v1382 = vunpack.c.l.b16 %v1374
  %v1383 = vunpack.c.h.b16 %v1374
  %v1384 = vunpack.c.l.b16 %v1375
  %v1385 = vunpack.c.h.b16 %v1375
  %v1386 = vunpack.c.l.b16 %v1376
  %v1387 = vunpack.c.h.b16 %v1376
  %v1388 = vunpack.c.l.b16 %v1377
  %v1389 = vunpack.c.h.b16 %v1377
  %v1390 = vpack.c.b16 %v1382, %v1382
  %v1391 = vpack.c.b16 %v1383, %v1383
  %v1392 = vpack.c.b16 %v1384, %v1384
  %v1393 = vpack.c.b16 %v1385, %v1385
  %v1394 = vpack.c.b16 %v1386, %v1386
  %v1395 = vpack.c.b16 %v1387, %v1387
  %v1396 = vpack.c.b16 %v1388, %v1388
  %v1397 = vpack.c.b16 %v1389, %v1389
  %1406 = vst [vmem:[#allocation2 + $0xc] sm:$0xf] %v1390
  %1407 = vst [vmem:[#allocation2 + $0x1c] sm:$0xf] %v1391
  %1408 = vst [vmem:[#allocation2 + $0x2c] sm:$0xf] %v1392
  %1409 = vst [vmem:[#allocation2 + $0x3c] sm:$0xf] %v1393
  %1410 = vst [vmem:[#allocation2 + $0x4c] sm:$0xf] %v1394
  %1411 = vst [vmem:[#allocation2 + $0x5c] sm:$0xf] %v1395
  %1412 = vst [vmem:[#allocation2 + $0x6c] sm:$0xf] %v1396
  %1413 = vst [vmem:[#allocation2 + $0x7c] sm:$0xf] %v1397
  %v1414 = vld [vmem:[#allocation2] sm:$0xff]
  %v1415 = vld [vmem:[#allocation2 + $0x8] sm:$0xff]
  %v1416 = vld [vmem:[#allocation2 + $0x10] sm:$0xff]
  %v1417 = vld [vmem:[#allocation2 + $0x18] sm:$0xff]
  %v1418 = vld [vmem:[#allocation2 + $0x20] sm:$0xff]
  %v1419 = vld [vmem:[#allocation2 + $0x28] sm:$0xff]
  %v1420 = vld [vmem:[#allocation2 + $0x30] sm:$0xff]
  %v1421 = vld [vmem:[#allocation2 + $0x38] sm:$0xff]
  %v1422 = vld [vmem:[#allocation2 + $0x40] sm:$0xff]
  %v1423 = vld [vmem:[#allocation2 + $0x48] sm:$0xff]
  %v1424 = vld [vmem:[#allocation2 + $0x50] sm:$0xff]
  %v1425 = vld [vmem:[#allocation2 + $0x58] sm:$0xff]
  %v1426 = vld [vmem:[#allocation2 + $0x60] sm:$0xff]
  %v1427 = vld [vmem:[#allocation2 + $0x68] sm:$0xff]
  %v1428 = vld [vmem:[#allocation2 + $0x70] sm:$0xff]
  %v1429 = vld [vmem:[#allocation2 + $0x78] sm:$0xff]
  %s1430 = scalar_lea.vmem %s4, 256
  %v1431 = vld [vmem:[%s1430] sm:$0xf]
  %v1432 = vld [vmem:[%s1430 + $0x4] sm:$0xf]
  %v1433 = vld [vmem:[%s1430 + $0x8] sm:$0xf]
  %v1434 = vld [vmem:[%s1430 + $0xc] sm:$0xf]
  %v1435 = vld [vmem:[%s1430 + $0x10] sm:$0xf]
  %v1436 = vld [vmem:[%s1430 + $0x14] sm:$0xf]
  %v1437 = vld [vmem:[%s1430 + $0x18] sm:$0xf]
  %v1438 = vld [vmem:[%s1430 + $0x1c] sm:$0xf]
  %v1439 = vld [vmem:[%s1430 + $0x20] sm:$0xf]
  %v1440 = vld [vmem:[%s1430 + $0x24] sm:$0xf]
  %v1441 = vld [vmem:[%s1430 + $0x28] sm:$0xf]
  %v1442 = vld [vmem:[%s1430 + $0x2c] sm:$0xf]
  %v1443 = vld [vmem:[%s1430 + $0x30] sm:$0xf]
  %v1444 = vld [vmem:[%s1430 + $0x34] sm:$0xf]
  %v1445 = vld [vmem:[%s1430 + $0x38] sm:$0xf]
  %v1446 = vld [vmem:[%s1430 + $0x3c] sm:$0xf]
  %v1447 = vld [vmem:[%s1430 + $0x40] sm:$0xf]
  %v1448 = vld [vmem:[%s1430 + $0x44] sm:$0xf]
  %v1449 = vld [vmem:[%s1430 + $0x48] sm:$0xf]
  %v1450 = vld [vmem:[%s1430 + $0x4c] sm:$0xf]
  %v1451 = vld [vmem:[%s1430 + $0x50] sm:$0xf]
  %v1452 = vld [vmem:[%s1430 + $0x54] sm:$0xf]
  %v1453 = vld [vmem:[%s1430 + $0x58] sm:$0xf]
  %v1454 = vld [vmem:[%s1430 + $0x5c] sm:$0xf]
  %v1455 = vld [vmem:[%s1430 + $0x60] sm:$0xf]
  %v1456 = vld [vmem:[%s1430 + $0x64] sm:$0xf]
  %v1457 = vld [vmem:[%s1430 + $0x68] sm:$0xf]
  %v1458 = vld [vmem:[%s1430 + $0x6c] sm:$0xf]
  %v1459 = vld [vmem:[%s1430 + $0x70] sm:$0xf]
  %v1460 = vld [vmem:[%s1430 + $0x74] sm:$0xf]
  %v1461 = vld [vmem:[%s1430 + $0x78] sm:$0xf]
  %v1462 = vld [vmem:[%s1430 + $0x7c] sm:$0xf]
  %v1463 = vld [vmem:[%s1430 + $0x80] sm:$0xf]
  %v1464 = vld [vmem:[%s1430 + $0x84] sm:$0xf]
  %v1465 = vld [vmem:[%s1430 + $0x88] sm:$0xf]
  %v1466 = vld [vmem:[%s1430 + $0x8c] sm:$0xf]
  %v1467 = vld [vmem:[%s1430 + $0x90] sm:$0xf]
  %v1468 = vld [vmem:[%s1430 + $0x94] sm:$0xf]
  %v1469 = vld [vmem:[%s1430 + $0x98] sm:$0xf]
  %v1470 = vld [vmem:[%s1430 + $0x9c] sm:$0xf]
  %v1471 = vld [vmem:[%s1430 + $0xa0] sm:$0xf]
  %v1472 = vld [vmem:[%s1430 + $0xa4] sm:$0xf]
  %v1473 = vld [vmem:[%s1430 + $0xa8] sm:$0xf]
  %v1474 = vld [vmem:[%s1430 + $0xac] sm:$0xf]
  %v1475 = vld [vmem:[%s1430 + $0xb0] sm:$0xf]
  %v1476 = vld [vmem:[%s1430 + $0xb4] sm:$0xf]
  %v1477 = vld [vmem:[%s1430 + $0xb8] sm:$0xf]
  %v1478 = vld [vmem:[%s1430 + $0xbc] sm:$0xf]
  %v1479 = vld [vmem:[%s1430 + $0xc0] sm:$0xf]
  %v1480 = vld [vmem:[%s1430 + $0xc4] sm:$0xf]
  %v1481 = vld [vmem:[%s1430 + $0xc8] sm:$0xf]
  %v1482 = vld [vmem:[%s1430 + $0xcc] sm:$0xf]
  %v1483 = vld [vmem:[%s1430 + $0xd0] sm:$0xf]
  %v1484 = vld [vmem:[%s1430 + $0xd4] sm:$0xf]
  %v1485 = vld [vmem:[%s1430 + $0xd8] sm:$0xf]
  %v1486 = vld [vmem:[%s1430 + $0xdc] sm:$0xf]
  %v1487 = vld [vmem:[%s1430 + $0xe0] sm:$0xf]
  %v1488 = vld [vmem:[%s1430 + $0xe4] sm:$0xf]
  %v1489 = vld [vmem:[%s1430 + $0xe8] sm:$0xf]
  %v1490 = vld [vmem:[%s1430 + $0xec] sm:$0xf]
  %v1491 = vld [vmem:[%s1430 + $0xf0] sm:$0xf]
  %v1492 = vld [vmem:[%s1430 + $0xf4] sm:$0xf]
  %v1493 = vld [vmem:[%s1430 + $0xf8] sm:$0xf]
  %v1494 = vld [vmem:[%s1430 + $0xfc] sm:$0xf]
  %s1495 = scalar_lea.vmem %s5, 1
  %v1496 = vld [vmem:[%s1495] sm:$0x1]
  %v1498 = vlaneseq
  %v1499 = vshrl.u32 %v1498, 7
  %v1500 = vsub.s32 0, %v1499
  %v1501 = vrot.slane %v1496, %v1500
  %v1519 = vunpack.c.l.b16 %v1414
  %v1520 = vunpack.c.h.b16 %v1414
  %v1521 = vunpack.c.l.b16 %v1415
  %v1522 = vunpack.c.h.b16 %v1415
  %v1523 = vunpack.c.l.b16 %v1416
  %v1524 = vunpack.c.h.b16 %v1416
  %v1525 = vunpack.c.l.b16 %v1417
  %v1526 = vunpack.c.h.b16 %v1417
  %v1527 = vunpack.c.l.b16 %v1418
  %v1528 = vunpack.c.h.b16 %v1418
  %v1529 = vunpack.c.l.b16 %v1419
  %v1530 = vunpack.c.h.b16 %v1419
  %v1531 = vunpack.c.l.b16 %v1420
  %v1532 = vunpack.c.h.b16 %v1420
  %v1533 = vunpack.c.l.b16 %v1421
  %v1534 = vunpack.c.h.b16 %v1421
  %v1535 = vunpack.c.l.b16 %v1422
  %v1536 = vunpack.c.h.b16 %v1422
  %v1537 = vunpack.c.l.b16 %v1423
  %v1538 = vunpack.c.h.b16 %v1423
  %v1539 = vunpack.c.l.b16 %v1424
  %v1540 = vunpack.c.h.b16 %v1424
  %v1541 = vunpack.c.l.b16 %v1425
  %v1542 = vunpack.c.h.b16 %v1425
  %v1543 = vunpack.c.l.b16 %v1426
  %v1544 = vunpack.c.h.b16 %v1426
  %v1545 = vunpack.c.l.b16 %v1427
  %v1546 = vunpack.c.h.b16 %v1427
  %v1547 = vunpack.c.l.b16 %v1428
  %v1548 = vunpack.c.h.b16 %v1428
  %v1549 = vunpack.c.l.b16 %v1429
  %v1550 = vunpack.c.h.b16 %v1429
  %v1551 = vpack.c.b16 %v1523, %v1519
  %v1552 = vpack.c.b16 %v1524, %v1520
  %v1553 = vpack.c.b16 %v1525, %v1521
  %v1554 = vpack.c.b16 %v1526, %v1522
  %v1555 = vpack.c.b16 %v1531, %v1527
  %v1556 = vpack.c.b16 %v1532, %v1528
  %v1557 = vpack.c.b16 %v1533, %v1529
  %v1558 = vpack.c.b16 %v1534, %v1530
  %v1559 = vpack.c.b16 %v1539, %v1535
  %v1560 = vpack.c.b16 %v1540, %v1536
  %v1561 = vpack.c.b16 %v1541, %v1537
  %v1562 = vpack.c.b16 %v1542, %v1538
  %v1563 = vpack.c.b16 %v1547, %v1543
  %v1564 = vpack.c.b16 %v1548, %v1544
  %v1565 = vpack.c.b16 %v1549, %v1545
  %v1566 = vpack.c.b16 %v1550, %v1546
  %v1647 = vunpack.c.l.b16 %v1431
  %v1648 = vunpack.c.l.b16 %v1432
  %v1649 = vunpack.c.l.b16 %v1433
  %v1650 = vunpack.c.l.b16 %v1434
  %v1651 = vunpack.c.l.b16 %v1435
  %v1652 = vunpack.c.l.b16 %v1436
  %v1653 = vunpack.c.l.b16 %v1437
  %v1654 = vunpack.c.l.b16 %v1438
  %v1655 = vunpack.c.l.b16 %v1439
  %v1656 = vunpack.c.l.b16 %v1440
  %v1657 = vunpack.c.l.b16 %v1441
  %v1658 = vunpack.c.l.b16 %v1442
  %v1659 = vunpack.c.l.b16 %v1443
  %v1660 = vunpack.c.l.b16 %v1444
  %v1661 = vunpack.c.l.b16 %v1445
  %v1662 = vunpack.c.l.b16 %v1446
  %v1663 = vunpack.c.l.b16 %v1447
  %v1664 = vunpack.c.l.b16 %v1448
  %v1665 = vunpack.c.l.b16 %v1449
  %v1666 = vunpack.c.l.b16 %v1450
  %v1667 = vunpack.c.l.b16 %v1451
  %v1668 = vunpack.c.l.b16 %v1452
  %v1669 = vunpack.c.l.b16 %v1453
  %v1670 = vunpack.c.l.b16 %v1454
  %v1671 = vunpack.c.l.b16 %v1455
  %v1672 = vunpack.c.l.b16 %v1456
  %v1673 = vunpack.c.l.b16 %v1457
  %v1674 = vunpack.c.l.b16 %v1458
  %v1675 = vunpack.c.l.b16 %v1459
  %v1676 = vunpack.c.l.b16 %v1460
  %v1677 = vunpack.c.l.b16 %v1461
  %v1678 = vunpack.c.l.b16 %v1462
  %v1679 = vunpack.c.l.b16 %v1463
  %v1680 = vunpack.c.l.b16 %v1464
  %v1681 = vunpack.c.l.b16 %v1465
  %v1682 = vunpack.c.l.b16 %v1466
  %v1683 = vunpack.c.l.b16 %v1467
  %v1684 = vunpack.c.l.b16 %v1468
  %v1685 = vunpack.c.l.b16 %v1469
  %v1686 = vunpack.c.l.b16 %v1470
  %v1687 = vunpack.c.l.b16 %v1471
  %v1688 = vunpack.c.l.b16 %v1472
  %v1689 = vunpack.c.l.b16 %v1473
  %v1690 = vunpack.c.l.b16 %v1474
  %v1691 = vunpack.c.l.b16 %v1475
  %v1692 = vunpack.c.l.b16 %v1476
  %v1693 = vunpack.c.l.b16 %v1477
  %v1694 = vunpack.c.l.b16 %v1478
  %v1695 = vunpack.c.l.b16 %v1479
  %v1696 = vunpack.c.l.b16 %v1480
  %v1697 = vunpack.c.l.b16 %v1481
  %v1698 = vunpack.c.l.b16 %v1482
  %v1699 = vunpack.c.l.b16 %v1483
  %v1700 = vunpack.c.l.b16 %v1484
  %v1701 = vunpack.c.l.b16 %v1485
  %v1702 = vunpack.c.l.b16 %v1486
  %v1703 = vunpack.c.l.b16 %v1487
  %v1704 = vunpack.c.l.b16 %v1488
  %v1705 = vunpack.c.l.b16 %v1489
  %v1706 = vunpack.c.l.b16 %v1490
  %v1707 = vunpack.c.l.b16 %v1491
  %v1708 = vunpack.c.l.b16 %v1492
  %v1709 = vunpack.c.l.b16 %v1493
  %v1710 = vunpack.c.l.b16 %v1494
  %v1711 = vpack.c.b16 %v1648, %v1647
  %v1712 = vpack.c.b16 %v1650, %v1649
  %v1713 = vpack.c.b16 %v1652, %v1651
  %v1714 = vpack.c.b16 %v1654, %v1653
  %v1715 = vpack.c.b16 %v1656, %v1655
  %v1716 = vpack.c.b16 %v1658, %v1657
  %v1717 = vpack.c.b16 %v1660, %v1659
  %v1718 = vpack.c.b16 %v1662, %v1661
  %v1719 = vpack.c.b16 %v1664, %v1663
  %v1720 = vpack.c.b16 %v1666, %v1665
  %v1721 = vpack.c.b16 %v1668, %v1667
  %v1722 = vpack.c.b16 %v1670, %v1669
  %v1723 = vpack.c.b16 %v1672, %v1671
  %v1724 = vpack.c.b16 %v1674, %v1673
  %v1725 = vpack.c.b16 %v1676, %v1675
  %v1726 = vpack.c.b16 %v1678, %v1677
  %v1727 = vpack.c.b16 %v1680, %v1679
  %v1728 = vpack.c.b16 %v1682, %v1681
  %v1729 = vpack.c.b16 %v1684, %v1683
  %v1730 = vpack.c.b16 %v1686, %v1685
  %v1731 = vpack.c.b16 %v1688, %v1687
  %v1732 = vpack.c.b16 %v1690, %v1689
  %v1733 = vpack.c.b16 %v1692, %v1691
  %v1734 = vpack.c.b16 %v1694, %v1693
  %v1735 = vpack.c.b16 %v1696, %v1695
  %v1736 = vpack.c.b16 %v1698, %v1697
  %v1737 = vpack.c.b16 %v1700, %v1699
  %v1738 = vpack.c.b16 %v1702, %v1701
  %v1739 = vpack.c.b16 %v1704, %v1703
  %v1740 = vpack.c.b16 %v1706, %v1705
  %v1741 = vpack.c.b16 %v1708, %v1707
  %v1742 = vpack.c.b16 %v1710, %v1709
  %1775 = vmatprep.subr.bf16.mxu0 0
  %1776 = vmatpush1.bf16.msra.mxu0 %v1718
  %1777 = vmatprep.subr.bf16.mxu0 0
  %1778 = vmatpush1.bf16.msra.mxu0 %v1717
  %1779 = vmatprep.subr.bf16.mxu0 0
  %1780 = vmatpush1.bf16.msra.mxu0 %v1716
  %1781 = vmatprep.subr.bf16.mxu0 0
  %1782 = vmatpush1.bf16.msra.mxu0 %v1715
  %1783 = vmatprep.subr.bf16.mxu0 0
  %1784 = vmatpush1.bf16.msra.mxu0 %v1714
  %1785 = vmatprep.subr.bf16.mxu0 0
  %1786 = vmatpush1.bf16.msra.mxu0 %v1713
  %1787 = vmatprep.subr.bf16.mxu0 0
  %1788 = vmatpush1.bf16.msra.mxu0 %v1712
  %1789 = vmatprep.subr.bf16.mxu0 0
  %1790 = vmatpush1.bf16.msra.mxu0 %v1711
  %1791 = vmatprep.subr.bf16.mxu0 0
  %1792 = vmatpush2.bf16.msra.mxu0 %v1726
  %1793 = vmatprep.subr.bf16.mxu0 0
  %1794 = vmatpush2.bf16.msra.mxu0 %v1725
  %1795 = vmatprep.subr.bf16.mxu0 0
  %1796 = vmatpush2.bf16.msra.mxu0 %v1724
  %1797 = vmatprep.subr.bf16.mxu0 0
  %1798 = vmatpush2.bf16.msra.mxu0 %v1723
  %1799 = vmatprep.subr.bf16.mxu0 0
  %1800 = vmatpush2.bf16.msra.mxu0 %v1722
  %1801 = vmatprep.subr.bf16.mxu0 0
  %1802 = vmatpush2.bf16.msra.mxu0 %v1721
  %1803 = vmatprep.subr.bf16.mxu0 0
  %1804 = vmatpush2.bf16.msra.mxu0 %v1720
  %1805 = vmatprep.subr.bf16.mxu0 0
  %1806 = vmatpush2.bf16.msra.mxu0 %v1719
  %1807 = vmatprep.mubr.bf16.mxu0 %v1552
  %1808 = vmatmul.mubr.bf16.gmra.mxu0 %v1551
  %v1809 = vpop.f32.mrf.mxu0
  %v1810 = vadd.f32 %v1501, %v1809
  %v1811 = vpop.f32.mrf.mxu0
  %v1812 = vpop.f32.mrf.mxu0
  %v1813 = vadd.f32 %v1501, %v1812
  %v1814 = vpop.f32.mrf.mxu0
  %1815 = vmatprep.mubr.bf16.mxu0 %v1556
  %1816 = vmatmul.mubr.bf16.gmra.mxu0 %v1555
  %v1817 = vpop.f32.mrf.mxu0
  %v1818 = vadd.f32 %v1501, %v1817
  %v1819 = vpop.f32.mrf.mxu0
  %v1820 = vpop.f32.mrf.mxu0
  %v1821 = vadd.f32 %v1501, %v1820
  %v1822 = vpop.f32.mrf.mxu0
  %1823 = vmatprep.mubr.bf16.mxu0 %v1560
  %1824 = vmatmul.mubr.bf16.gmra.mxu0 %v1559
  %v1825 = vpop.f32.mrf.mxu0
  %v1826 = vadd.f32 %v1501, %v1825
  %v1827 = vpop.f32.mrf.mxu0
  %v1828 = vpop.f32.mrf.mxu0
  %v1829 = vadd.f32 %v1501, %v1828
  %v1830 = vpop.f32.mrf.mxu0
  %1831 = vmatprep.mubr.bf16.mxu0 %v1564
  %1832 = vmatmul.mubr.bf16.gmra.mxu0 %v1563
  %v1833 = vpop.f32.mrf.mxu0
  %v1834 = vadd.f32 %v1501, %v1833
  %v1835 = vpop.f32.mrf.mxu0
  %v1836 = vpop.f32.mrf.mxu0
  %v1837 = vadd.f32 %v1501, %v1836
  %v1838 = vpop.f32.mrf.mxu0
  %1839 = vdwg.mxu0
  %1840 = vmatprep.subr.bf16.mxu0 0
  %1841 = vmatpush1.bf16.msra.mxu0 %v1734
  %1842 = vmatprep.subr.bf16.mxu0 0
  %1843 = vmatpush1.bf16.msra.mxu0 %v1733
  %1844 = vmatprep.subr.bf16.mxu0 0
  %1845 = vmatpush1.bf16.msra.mxu0 %v1732
  %1846 = vmatprep.subr.bf16.mxu0 0
  %1847 = vmatpush1.bf16.msra.mxu0 %v1731
  %1848 = vmatprep.subr.bf16.mxu0 0
  %1849 = vmatpush1.bf16.msra.mxu0 %v1730
  %1850 = vmatprep.subr.bf16.mxu0 0
  %1851 = vmatpush1.bf16.msra.mxu0 %v1729
  %1852 = vmatprep.subr.bf16.mxu0 0
  %1853 = vmatpush1.bf16.msra.mxu0 %v1728
  %1854 = vmatprep.subr.bf16.mxu0 0
  %1855 = vmatpush1.bf16.msra.mxu0 %v1727
  %1856 = vmatprep.subr.bf16.mxu0 0
  %1857 = vmatpush2.bf16.msra.mxu0 %v1742
  %1858 = vmatprep.subr.bf16.mxu0 0
  %1859 = vmatpush2.bf16.msra.mxu0 %v1741
  %1860 = vmatprep.subr.bf16.mxu0 0
  %1861 = vmatpush2.bf16.msra.mxu0 %v1740
  %1862 = vmatprep.subr.bf16.mxu0 0
  %1863 = vmatpush2.bf16.msra.mxu0 %v1739
  %1864 = vmatprep.subr.bf16.mxu0 0
  %1865 = vmatpush2.bf16.msra.mxu0 %v1738
  %1866 = vmatprep.subr.bf16.mxu0 0
  %1867 = vmatpush2.bf16.msra.mxu0 %v1737
  %1868 = vmatprep.subr.bf16.mxu0 0
  %1869 = vmatpush2.bf16.msra.mxu0 %v1736
  %1870 = vmatprep.subr.bf16.mxu0 0
  %1871 = vmatpush2.bf16.msra.mxu0 %v1735
  %1872 = vmatprep.mubr.bf16.mxu0 %v1554
  %1873 = vmatmul.mubr.bf16.gmra.mxu0 %v1553
  %v1874 = vpop.f32.mrf.mxu0
  %v1875 = vadd.f32 %v1810, %v1874
  %v1876 = vpop.f32.mrf.mxu0
  %v1877 = vpop.f32.mrf.mxu0
  %v1878 = vadd.f32 %v1813, %v1877
  %v1879 = vpop.f32.mrf.mxu0
  %1880 = vmatprep.mubr.bf16.mxu0 %v1558
  %1881 = vmatmul.mubr.bf16.gmra.mxu0 %v1557
  %v1882 = vpop.f32.mrf.mxu0
  %v1883 = vadd.f32 %v1818, %v1882
  %v1884 = vpop.f32.mrf.mxu0
  %v1885 = vpop.f32.mrf.mxu0
  %v1886 = vadd.f32 %v1821, %v1885
  %v1887 = vpop.f32.mrf.mxu0
  %1888 = vmatprep.mubr.bf16.mxu0 %v1562
  %1889 = vmatmul.mubr.bf16.gmra.mxu0 %v1561
  %v1890 = vpop.f32.mrf.mxu0
  %v1891 = vadd.f32 %v1826, %v1890
  %v1892 = vpop.f32.mrf.mxu0
  %v1893 = vpop.f32.mrf.mxu0
  %v1894 = vadd.f32 %v1829, %v1893
  %v1895 = vpop.f32.mrf.mxu0
  %1896 = vmatprep.mubr.bf16.mxu0 %v1566
  %1897 = vmatmul.mubr.bf16.gmra.mxu0 %v1565
  %v1898 = vpop.f32.mrf.mxu0
  %v1899 = vadd.f32 %v1834, %v1898
  %v1900 = vpop.f32.mrf.mxu0
  %v1901 = vpop.f32.mrf.mxu0
  %v1902 = vadd.f32 %v1837, %v1901
  %v1903 = vpop.f32.mrf.mxu0
  %1904 = vdwg.mxu0
  %v1905 = vmax.f32 %v1875, 0.0
  %v1906 = vmax.f32 %v1878, 0.0
  %v1907 = vmax.f32 %v1883, 0.0
  %v1908 = vmax.f32 %v1886, 0.0
  %v1909 = vmax.f32 %v1891, 0.0
  %v1910 = vmax.f32 %v1894, 0.0
  %v1911 = vmax.f32 %v1899, 0.0
  %v1912 = vmax.f32 %v1902, 0.0
  %v1913 = vpack.c.bf16 %v1906, %v1905
  %v1914 = vpack.c.bf16 %v1908, %v1907
  %v1915 = vpack.c.bf16 %v1910, %v1909
  %v1916 = vpack.c.bf16 %v1912, %v1911
  %v1917 = vld [vmem:[%s6] sm:$0xf]
  %v1918 = vld [vmem:[%s6 + $0x4] sm:$0xf]
  %v1919 = vld [vmem:[%s6 + $0x8] sm:$0xf]
  %v1920 = vld [vmem:[%s6 + $0xc] sm:$0xf]
  %v1921 = vld [vmem:[%s6 + $0x10] sm:$0xf]
  %v1922 = vld [vmem:[%s6 + $0x14] sm:$0xf]
  %v1923 = vld [vmem:[%s6 + $0x18] sm:$0xf]
  %v1924 = vld [vmem:[%s6 + $0x1c] sm:$0xf]
  %v1925 = vld [vmem:[%s6 + $0x20] sm:$0xf]
  %v1926 = vld [vmem:[%s6 + $0x24] sm:$0xf]
  %v1927 = vld [vmem:[%s6 + $0x28] sm:$0xf]
  %v1928 = vld [vmem:[%s6 + $0x2c] sm:$0xf]
  %v1929 = vld [vmem:[%s6 + $0x30] sm:$0xf]
  %v1930 = vld [vmem:[%s6 + $0x34] sm:$0xf]
  %v1931 = vld [vmem:[%s6 + $0x38] sm:$0xf]
  %v1932 = vld [vmem:[%s6 + $0x3c] sm:$0xf]
  %v1933 = vld [vmem:[%s7] sm:$0x1]
  %v1935 = vlaneseq
  %v1936 = vshrl.u32 %v1935, 7
  %v1937 = vsub.s32 0, %v1936
  %v1938 = vrot.slane %v1933, %v1937
  %v1956 = vunpack.c.l.b16 %v1917
  %v1957 = vunpack.c.l.b16 %v1918
  %v1958 = vunpack.c.l.b16 %v1919
  %v1959 = vunpack.c.l.b16 %v1920
  %v1960 = vunpack.c.l.b16 %v1921
  %v1961 = vunpack.c.l.b16 %v1922
  %v1962 = vunpack.c.l.b16 %v1923
  %v1963 = vunpack.c.l.b16 %v1924
  %v1964 = vunpack.c.l.b16 %v1925
  %v1965 = vunpack.c.l.b16 %v1926
  %v1966 = vunpack.c.l.b16 %v1927
  %v1967 = vunpack.c.l.b16 %v1928
  %v1968 = vunpack.c.l.b16 %v1929
  %v1969 = vunpack.c.l.b16 %v1930
  %v1970 = vunpack.c.l.b16 %v1931
  %v1971 = vunpack.c.l.b16 %v1932
  %v1972 = vpack.c.b16 %v1957, %v1956
  %v1973 = vpack.c.b16 %v1959, %v1958
  %v1974 = vpack.c.b16 %v1961, %v1960
  %v1975 = vpack.c.b16 %v1963, %v1962
  %v1976 = vpack.c.b16 %v1965, %v1964
  %v1977 = vpack.c.b16 %v1967, %v1966
  %v1978 = vpack.c.b16 %v1969, %v1968
  %v1979 = vpack.c.b16 %v1971, %v1970
  %1988 = vmatprep.subr.bf16.mxu0 0
  %1989 = vmatpush1.bf16.msra.mxu0 %v1979
  %1990 = vmatprep.subr.bf16.mxu0 0
  %1991 = vmatpush1.bf16.msra.mxu0 %v1978
  %1992 = vmatprep.subr.bf16.mxu0 0
  %1993 = vmatpush1.bf16.msra.mxu0 %v1977
  %1994 = vmatprep.subr.bf16.mxu0 0
  %1995 = vmatpush1.bf16.msra.mxu0 %v1976
  %1996 = vmatprep.subr.bf16.mxu0 0
  %1997 = vmatpush1.bf16.msra.mxu0 %v1975
  %1998 = vmatprep.subr.bf16.mxu0 0
  %1999 = vmatpush1.bf16.msra.mxu0 %v1974
  %2000 = vmatprep.subr.bf16.mxu0 0
  %2001 = vmatpush1.bf16.msra.mxu0 %v1973
  %2002 = vmatprep.subr.bf16.mxu0 0
  %2003 = vmatpush1.bf16.msra.mxu0 %v1972
  %2004 = vmatprep.subr.bf16.mxu0 0
  %2005 = vmatpush2.bf16.msra.mxu0 0
  %2006 = vmatprep.subr.bf16.mxu0 0
  %2007 = vmatpush2.bf16.msra.mxu0 0
  %2008 = vmatprep.subr.bf16.mxu0 0
  %2009 = vmatpush2.bf16.msra.mxu0 0
  %2010 = vmatprep.subr.bf16.mxu0 0
  %2011 = vmatpush2.bf16.msra.mxu0 0
  %2012 = vmatprep.subr.bf16.mxu0 0
  %2013 = vmatpush2.bf16.msra.mxu0 0
  %2014 = vmatprep.subr.bf16.mxu0 0
  %2015 = vmatpush2.bf16.msra.mxu0 0
  %2016 = vmatprep.subr.bf16.mxu0 0
  %2017 = vmatpush2.bf16.msra.mxu0 0
  %2018 = vmatprep.subr.bf16.mxu0 0
  %2019 = vmatpush2.bf16.msra.mxu0 0
  %2020 = vmatprep.mubr.bf16.mxu0 0
  %2021 = vmatmul.mubr.bf16.gmra.mxu0 %v1913
  %v2022 = vpop.f32.mrf.mxu0
  %v2023 = vadd.f32 %v1938, %v2022
  %v2024 = vpop.f32.mrf.mxu0
  %v2025 = vpop.f32.mrf.mxu0
  %v2026 = vadd.f32 %v1938, %v2025
  %v2027 = vpop.f32.mrf.mxu0
  %2028 = vmatprep.mubr.bf16.mxu0 0
  %2029 = vmatmul.mubr.bf16.gmra.mxu0 %v1914
  %v2030 = vpop.f32.mrf.mxu0
  %v2031 = vadd.f32 %v1938, %v2030
  %v2032 = vpop.f32.mrf.mxu0
  %v2033 = vpop.f32.mrf.mxu0
  %v2034 = vadd.f32 %v1938, %v2033
  %v2035 = vpop.f32.mrf.mxu0
  %2036 = vmatprep.mubr.bf16.mxu0 0
  %2037 = vmatmul.mubr.bf16.gmra.mxu0 %v1915
  %v2038 = vpop.f32.mrf.mxu0
  %v2039 = vadd.f32 %v1938, %v2038
  %v2040 = vpop.f32.mrf.mxu0
  %v2041 = vpop.f32.mrf.mxu0
  %v2042 = vadd.f32 %v1938, %v2041
  %v2043 = vpop.f32.mrf.mxu0
  %2044 = vmatprep.mubr.bf16.mxu0 0
  %2045 = vmatmul.mubr.bf16.gmra.mxu0 %v1916
  %v2046 = vpop.f32.mrf.mxu0
  %v2047 = vadd.f32 %v1938, %v2046
  %v2048 = vpop.f32.mrf.mxu0
  %v2049 = vpop.f32.mrf.mxu0
  %v2050 = vadd.f32 %v1938, %v2049
  %v2051 = vpop.f32.mrf.mxu0
  %2052 = vdwg.mxu0
  %v2053 = vmax.f32 %v2023, 0.0
  %v2054 = vmax.f32 %v2026, 0.0
  %v2055 = vmax.f32 %v2031, 0.0
  %v2056 = vmax.f32 %v2034, 0.0
  %v2057 = vmax.f32 %v2039, 0.0
  %v2058 = vmax.f32 %v2042, 0.0
  %v2059 = vmax.f32 %v2047, 0.0
  %v2060 = vmax.f32 %v2050, 0.0
  %v2061 = vpack.c.bf16 %v2054, %v2053
  %v2062 = vpack.c.bf16 %v2056, %v2055
  %v2063 = vpack.c.bf16 %v2058, %v2057
  %v2064 = vpack.c.bf16 %v2060, %v2059
  %s2065 = scalar_lea.vmem %s6, 64
  %v2066 = vld [vmem:[%s2065] sm:$0xf]
  %v2067 = vld [vmem:[%s2065 + $0x4] sm:$0xf]
  %v2068 = vld [vmem:[%s2065 + $0x8] sm:$0xf]
  %v2069 = vld [vmem:[%s2065 + $0xc] sm:$0xf]
  %v2070 = vld [vmem:[%s2065 + $0x10] sm:$0xf]
  %v2071 = vld [vmem:[%s2065 + $0x14] sm:$0xf]
  %v2072 = vld [vmem:[%s2065 + $0x18] sm:$0xf]
  %v2073 = vld [vmem:[%s2065 + $0x1c] sm:$0xf]
  %v2074 = vld [vmem:[%s2065 + $0x20] sm:$0xf]
  %v2075 = vld [vmem:[%s2065 + $0x24] sm:$0xf]
  %v2076 = vld [vmem:[%s2065 + $0x28] sm:$0xf]
  %v2077 = vld [vmem:[%s2065 + $0x2c] sm:$0xf]
  %v2078 = vld [vmem:[%s2065 + $0x30] sm:$0xf]
  %v2079 = vld [vmem:[%s2065 + $0x34] sm:$0xf]
  %v2080 = vld [vmem:[%s2065 + $0x38] sm:$0xf]
  %v2081 = vld [vmem:[%s2065 + $0x3c] sm:$0xf]
  %s2082 = scalar_lea.vmem %s7, 1
  %v2083 = vld [vmem:[%s2082] sm:$0x1]
  %v2085 = vlaneseq
  %v2086 = vshrl.u32 %v2085, 7
  %v2087 = vsub.s32 0, %v2086
  %v2088 = vrot.slane %v2083, %v2087
  %v2106 = vunpack.c.l.b16 %v2066
  %v2107 = vunpack.c.l.b16 %v2067
  %v2108 = vunpack.c.l.b16 %v2068
  %v2109 = vunpack.c.l.b16 %v2069
  %v2110 = vunpack.c.l.b16 %v2070
  %v2111 = vunpack.c.l.b16 %v2071
  %v2112 = vunpack.c.l.b16 %v2072
  %v2113 = vunpack.c.l.b16 %v2073
  %v2114 = vunpack.c.l.b16 %v2074
  %v2115 = vunpack.c.l.b16 %v2075
  %v2116 = vunpack.c.l.b16 %v2076
  %v2117 = vunpack.c.l.b16 %v2077
  %v2118 = vunpack.c.l.b16 %v2078
  %v2119 = vunpack.c.l.b16 %v2079
  %v2120 = vunpack.c.l.b16 %v2080
  %v2121 = vunpack.c.l.b16 %v2081
  %v2122 = vpack.c.b16 %v2107, %v2106
  %v2123 = vpack.c.b16 %v2109, %v2108
  %v2124 = vpack.c.b16 %v2111, %v2110
  %v2125 = vpack.c.b16 %v2113, %v2112
  %v2126 = vpack.c.b16 %v2115, %v2114
  %v2127 = vpack.c.b16 %v2117, %v2116
  %v2128 = vpack.c.b16 %v2119, %v2118
  %v2129 = vpack.c.b16 %v2121, %v2120
  %2138 = vmatprep.subr.bf16.mxu0 0
  %2139 = vmatpush1.bf16.msra.mxu0 %v2129
  %2140 = vmatprep.subr.bf16.mxu0 0
  %2141 = vmatpush1.bf16.msra.mxu0 %v2128
  %2142 = vmatprep.subr.bf16.mxu0 0
  %2143 = vmatpush1.bf16.msra.mxu0 %v2127
  %2144 = vmatprep.subr.bf16.mxu0 0
  %2145 = vmatpush1.bf16.msra.mxu0 %v2126
  %2146 = vmatprep.subr.bf16.mxu0 0
  %2147 = vmatpush1.bf16.msra.mxu0 %v2125
  %2148 = vmatprep.subr.bf16.mxu0 0
  %2149 = vmatpush1.bf16.msra.mxu0 %v2124
  %2150 = vmatprep.subr.bf16.mxu0 0
  %2151 = vmatpush1.bf16.msra.mxu0 %v2123
  %2152 = vmatprep.subr.bf16.mxu0 0
  %2153 = vmatpush1.bf16.msra.mxu0 %v2122
  %2154 = vmatprep.subr.bf16.mxu0 0
  %2155 = vmatpush2.bf16.msra.mxu0 0
  %2156 = vmatprep.subr.bf16.mxu0 0
  %2157 = vmatpush2.bf16.msra.mxu0 0
  %2158 = vmatprep.subr.bf16.mxu0 0
  %2159 = vmatpush2.bf16.msra.mxu0 0
  %2160 = vmatprep.subr.bf16.mxu0 0
  %2161 = vmatpush2.bf16.msra.mxu0 0
  %2162 = vmatprep.subr.bf16.mxu0 0
  %2163 = vmatpush2.bf16.msra.mxu0 0
  %2164 = vmatprep.subr.bf16.mxu0 0
  %2165 = vmatpush2.bf16.msra.mxu0 0
  %2166 = vmatprep.subr.bf16.mxu0 0
  %2167 = vmatpush2.bf16.msra.mxu0 0
  %2168 = vmatprep.subr.bf16.mxu0 0
  %2169 = vmatpush2.bf16.msra.mxu0 0
  %2170 = vmatprep.mubr.bf16.mxu0 0
  %2171 = vmatmul.mubr.bf16.gmra.mxu0 %v2061
  %v2172 = vpop.f32.mrf.mxu0
  %v2173 = vadd.f32 %v2088, %v2172
  %v2174 = vpop.f32.mrf.mxu0
  %v2175 = vpop.f32.mrf.mxu0
  %v2176 = vadd.f32 %v2088, %v2175
  %v2177 = vpop.f32.mrf.mxu0
  %2178 = vmatprep.mubr.bf16.mxu0 0
  %2179 = vmatmul.mubr.bf16.gmra.mxu0 %v2062
  %v2180 = vpop.f32.mrf.mxu0
  %v2181 = vadd.f32 %v2088, %v2180
  %v2182 = vpop.f32.mrf.mxu0
  %v2183 = vpop.f32.mrf.mxu0
  %v2184 = vadd.f32 %v2088, %v2183
  %v2185 = vpop.f32.mrf.mxu0
  %2186 = vmatprep.mubr.bf16.mxu0 0
  %2187 = vmatmul.mubr.bf16.gmra.mxu0 %v2063
  %v2188 = vpop.f32.mrf.mxu0
  %v2189 = vadd.f32 %v2088, %v2188
  %v2190 = vpop.f32.mrf.mxu0
  %v2191 = vpop.f32.mrf.mxu0
  %v2192 = vadd.f32 %v2088, %v2191
  %v2193 = vpop.f32.mrf.mxu0
  %2194 = vmatprep.mubr.bf16.mxu0 0
  %2195 = vmatmul.mubr.bf16.gmra.mxu0 %v2064
  %v2196 = vpop.f32.mrf.mxu0
  %v2197 = vadd.f32 %v2088, %v2196
  %v2198 = vpop.f32.mrf.mxu0
  %v2199 = vpop.f32.mrf.mxu0
  %v2200 = vadd.f32 %v2088, %v2199
  %v2201 = vpop.f32.mrf.mxu0
  %2202 = vdwg.mxu0
  %v2203 = vmax.f32 %v2173, 0.0
  %v2204 = vmax.f32 %v2176, 0.0
  %v2205 = vmax.f32 %v2181, 0.0
  %v2206 = vmax.f32 %v2184, 0.0
  %v2207 = vmax.f32 %v2189, 0.0
  %v2208 = vmax.f32 %v2192, 0.0
  %v2209 = vmax.f32 %v2197, 0.0
  %v2210 = vmax.f32 %v2200, 0.0
  %v2211 = vld [vmem:[%s8] sm:$0xff]
  %v2212 = vld [vmem:[%s8 + $0x8] sm:$0xff]
  %v2213 = vld [vmem:[%s8 + $0x10] sm:$0xff]
  %v2214 = vld [vmem:[%s8 + $0x18] sm:$0xff]
  %v2215 = vld [vmem:[%s8 + $0x20] sm:$0xff]
  %v2216 = vld [vmem:[%s8 + $0x28] sm:$0xff]
  %v2217 = vld [vmem:[%s8 + $0x30] sm:$0xff]
  %v2218 = vld [vmem:[%s8 + $0x38] sm:$0xff]
  %v2219 = vld [vmem:[%s8 + $0x40] sm:$0xff]
  %v2220 = vld [vmem:[%s8 + $0x48] sm:$0xff]
  %v2221 = vld [vmem:[%s8 + $0x50] sm:$0xff]
  %v2222 = vld [vmem:[%s8 + $0x58] sm:$0xff]
  %v2223 = vld [vmem:[%s8 + $0x60] sm:$0xff]
  %v2224 = vld [vmem:[%s8 + $0x68] sm:$0xff]
  %v2225 = vld [vmem:[%s8 + $0x70] sm:$0xff]
  %v2226 = vld [vmem:[%s8 + $0x78] sm:$0xff]
  %s2227 = sld [smem:[#allocation3]]
  %v2228 = vstv %s2227
  %2229 = vmatprep.subr.mxu0 0.0
  %2230 = vmatpush1.msra.mxu0 %v2226
  %2231 = vmatprep.subr.mxu0 0.0
  %2232 = vmatpush1.msra.mxu0 %v2225
  %2233 = vmatprep.subr.mxu0 0.0
  %2234 = vmatpush1.msra.mxu0 %v2224
  %2235 = vmatprep.subr.mxu0 0.0
  %2236 = vmatpush1.msra.mxu0 %v2223
  %2237 = vmatprep.subr.mxu0 0.0
  %2238 = vmatpush1.msra.mxu0 %v2222
  %2239 = vmatprep.subr.mxu0 0.0
  %2240 = vmatpush1.msra.mxu0 %v2221
  %2241 = vmatprep.subr.mxu0 0.0
  %2242 = vmatpush1.msra.mxu0 %v2220
  %2243 = vmatprep.subr.mxu0 0.0
  %2244 = vmatpush1.msra.mxu0 %v2219
  %2245 = vmatprep.subr.mxu0 0.0
  %2246 = vmatpush1.msra.mxu0 %v2218
  %2247 = vmatprep.subr.mxu0 0.0
  %2248 = vmatpush1.msra.mxu0 %v2217
  %2249 = vmatprep.subr.mxu0 0.0
  %2250 = vmatpush1.msra.mxu0 %v2216
  %2251 = vmatprep.subr.mxu0 0.0
  %2252 = vmatpush1.msra.mxu0 %v2215
  %2253 = vmatprep.subr.mxu0 0.0
  %2254 = vmatpush1.msra.mxu0 %v2214
  %2255 = vmatprep.subr.mxu0 0.0
  %2256 = vmatpush1.msra.mxu0 %v2213
  %2257 = vmatprep.subr.mxu0 0.0
  %2258 = vmatpush1.msra.mxu0 %v2212
  %2259 = vmatprep.subr.mxu0 0.0
  %2260 = vmatpush1.msra.mxu0 %v2211
  %2261 = vmatprep.subr.mxu0 0.0
  %2262 = vmatpush2.msra.mxu0 0.0
  %2263 = vmatprep.subr.mxu0 0.0
  %2264 = vmatpush2.msra.mxu0 0.0
  %2265 = vmatprep.subr.mxu0 0.0
  %2266 = vmatpush2.msra.mxu0 0.0
  %2267 = vmatprep.subr.mxu0 0.0
  %2268 = vmatpush2.msra.mxu0 0.0
  %2269 = vmatprep.subr.mxu0 0.0
  %2270 = vmatpush2.msra.mxu0 0.0
  %2271 = vmatprep.subr.mxu0 0.0
  %2272 = vmatpush2.msra.mxu0 0.0
  %2273 = vmatprep.subr.mxu0 0.0
  %2274 = vmatpush2.msra.mxu0 0.0
  %2275 = vmatprep.subr.mxu0 0.0
  %2276 = vmatpush2.msra.mxu0 0.0
  %2277 = vmatprep.subr.mxu0 0.0
  %2278 = vmatpush2.msra.mxu0 0.0
  %2279 = vmatprep.subr.mxu0 0.0
  %2280 = vmatpush2.msra.mxu0 0.0
  %2281 = vmatprep.subr.mxu0 0.0
  %2282 = vmatpush2.msra.mxu0 0.0
  %2283 = vmatprep.subr.mxu0 0.0
  %2284 = vmatpush2.msra.mxu0 0.0
  %2285 = vmatprep.subr.mxu0 0.0
  %2286 = vmatpush2.msra.mxu0 0.0
  %2287 = vmatprep.subr.mxu0 0.0
  %2288 = vmatpush2.msra.mxu0 0.0
  %2289 = vmatprep.subr.mxu0 0.0
  %2290 = vmatpush2.msra.mxu0 0.0
  %2291 = vmatprep.subr.mxu0 0.0
  %2292 = vmatpush2.msra.mxu0 0.0
  %2293 = vmatprep.mubr.f32.mxu0 0.0
  %2294 = vmatmul.mubr.f32.gmra.mxu0 %v2203
  %v2295 = vpop.f32.mrf.mxu0
  %v2296 = vadd.f32 %v2228, %v2295
  %v2297 = vpop.f32.mrf.mxu0
  %2298 = vmatprep.mubr.f32.mxu0 0.0
  %2299 = vmatmul.mubr.f32.gmra.mxu0 %v2204
  %v2300 = vpop.f32.mrf.mxu0
  %v2301 = vadd.f32 %v2228, %v2300
  %v2302 = vpop.f32.mrf.mxu0
  %2303 = vmatprep.mubr.f32.mxu0 0.0
  %2304 = vmatmul.mubr.f32.gmra.mxu0 %v2205
  %v2305 = vpop.f32.mrf.mxu0
  %v2306 = vadd.f32 %v2228, %v2305
  %v2307 = vpop.f32.mrf.mxu0
  %2308 = vmatprep.mubr.f32.mxu0 0.0
  %2309 = vmatmul.mubr.f32.gmra.mxu0 %v2206
  %v2310 = vpop.f32.mrf.mxu0
  %v2311 = vadd.f32 %v2228, %v2310
  %v2312 = vpop.f32.mrf.mxu0
  %2313 = vmatprep.mubr.f32.mxu0 0.0
  %2314 = vmatmul.mubr.f32.gmra.mxu0 %v2207
  %v2315 = vpop.f32.mrf.mxu0
  %v2316 = vadd.f32 %v2228, %v2315
  %v2317 = vpop.f32.mrf.mxu0
  %2318 = vmatprep.mubr.f32.mxu0 0.0
  %2319 = vmatmul.mubr.f32.gmra.mxu0 %v2208
  %v2320 = vpop.f32.mrf.mxu0
  %v2321 = vadd.f32 %v2228, %v2320
  %v2322 = vpop.f32.mrf.mxu0
  %2323 = vmatprep.mubr.f32.mxu0 0.0
  %2324 = vmatmul.mubr.f32.gmra.mxu0 %v2209
  %v2325 = vpop.f32.mrf.mxu0
  %v2326 = vadd.f32 %v2228, %v2325
  %v2327 = vpop.f32.mrf.mxu0
  %2328 = vmatprep.mubr.f32.mxu0 0.0
  %2329 = vmatmul.mubr.f32.gmra.mxu0 %v2210
  %v2330 = vpop.f32.mrf.mxu0
  %v2331 = vadd.f32 %v2228, %v2330
  %v2332 = vpop.f32.mrf.mxu0
  %2333 = vdwg.mxu0
  %v2334 = vmax.f32 %v2296, 0.0
  %v2335 = vmax.f32 %v2301, 0.0
  %v2336 = vmax.f32 %v2306, 0.0
  %v2337 = vmax.f32 %v2311, 0.0
  %v2338 = vmax.f32 %v2316, 0.0
  %v2339 = vmax.f32 %v2321, 0.0
  %v2340 = vmax.f32 %v2326, 0.0
  %v2341 = vmax.f32 %v2331, 0.0
  %vm2342 = vcmask 7168
  %2343 = vst.msk [vmem:[%s10] sm:$0xff] %vm2342, %v2334
  %2344 = vst.msk [vmem:[%s10 + $0x8] sm:$0xff] %vm2342, %v2335
  %2345 = vst.msk [vmem:[%s10 + $0x10] sm:$0xff] %vm2342, %v2336
  %2346 = vst.msk [vmem:[%s10 + $0x18] sm:$0xff] %vm2342, %v2337
  %2347 = vst.msk [vmem:[%s10 + $0x20] sm:$0xff] %vm2342, %v2338
  %2348 = vst.msk [vmem:[%s10 + $0x28] sm:$0xff] %vm2342, %v2339
  %2349 = vst.msk [vmem:[%s10 + $0x30] sm:$0xff] %vm2342, %v2340
  %2350 = vst.msk [vmem:[%s10 + $0x38] sm:$0xff] %vm2342, %v2341
  // Predicated region
  $region42: #{hpt_tagconv_forward.1} parent=0 // pred_check
    _
  $region43: #{hpt_tagconv_forward.1} parent=0 // pred_check_branch
    %2352 = sbr.rel (0) target = $region45
  $region44: #{hpt_tagconv_forward.1} parent=0 // pred_region
    _
  $region45: #{hpt_tagconv_forward.1} parent=0 // pred_fallthru
    _
  // Predicated region
  $region46: #{hpt_tagconv_forward.1} parent=0 // pred_check
    _
  $region47: #{hpt_tagconv_forward.1} parent=0 // pred_check_branch
    %2354 = sbr.rel (0) target = $region49
  $region48: #{hpt_tagconv_forward.1} parent=0 // pred_region
    _
  $region49: #{hpt_tagconv_forward.1} parent=0 // pred_fallthru
    _

</llo_original>
